<compile_context>
chip_gen: v7x
topology: tpu7x:2x2x1
jax: 0.10.0
libtpu: 0.0.40
codegen_flags: <defaults>
</compile_context>

<pallas_src>
import jax
import jax.numpy as jnp
from jax.experimental import pallas as pl
from jax.experimental.pallas import tpu as pltpu

NEG_SLOPE = 0.01            # torch F.leaky_relu default negative_slope
MASK_BIAS = -1e30           # finite "-inf" for non-edges (avoids inf-inf NaNs)
VMEM_LIMIT = 48 * 1024 * 1024   # > 16/32 MiB scoped defaults, < v7x 64 MiB physical


def _pick_tile(n, target, align):
    """Largest tile <= target that divides n and is `align`-aligned, else full n."""
    if n <= target:
        return n
    t = (target // align) * align
    while t >= align:
        if n % t == 0:
            return t
        t -= align
    return n


def _proj_kernel(h_ref, w_ref, amat_ref, z_ref, s_ref):
    # z_all = h @ W_all : bf16 MXU operands, f32 accumulation, lane-dense output.
    z = jnp.dot(h_ref[...], w_ref[...], preferred_element_type=jnp.float32)
    z_ref[...] = z.astype(z_ref.dtype)
    # Per-head attn_fc scores (block-diagonal weights); kept in f32 (tiny: 2H cols).
    s_ref[...] = jnp.dot(z, amat_ref[...], preferred_element_type=jnp.float32)


def _make_attn_kernel(num_heads, d_out):
    """Flash-style masked softmax + aggregation over src tiles, all heads fused."""

    def kernel(sd_ref, sst_ref, zs_ref, bias_ref, out_ref, m_ref, l_ref, acc_ref):
        j = pl.program_id(1)

        @pl.when(j == 0)
        def _():
            m_ref[...] = jnp.full_like(m_ref, MASK_BIAS)
            l_ref[...] = jnp.zeros_like(l_ref)
            acc_ref[...] = jnp.zeros_like(acc_ref)

        bias = bias_ref[...].astype(jnp.float32)         # [tdst, tsrc]
        sd = sd_ref[...]                                 # [tdst, 2H]  (dst scores)
        sst = sst_ref[...]                               # [2H, tsrc]  (src scores, rows)
        zs = zs_ref[...]                                 # [tsrc, H*Dout] bf16

        for h in range(num_heads):
            s_dst = sd[:, 2 * h + 1:2 * h + 2]           # [tdst, 1]
            s_src = sst[2 * h:2 * h + 1, :]              # [1, tsrc]
            e = s_dst + s_src                            # [tdst, tsrc] f32
            # fused leaky_relu + additive adjacency bias (no mask selects)
            e = jnp.where(e > 0, e, NEG_SLOPE * e) + bias

            m_prev = m_ref[:, h:h + 1]
            m_new = jnp.maximum(m_prev, jnp.max(e, axis=-1, keepdims=True))
            a = jnp.exp(m_prev - m_new)                  # rescale of running stats
            p = jnp.exp(e - m_new)
            l_ref[:, h:h + 1] = a * l_ref[:, h:h + 1] + jnp.sum(p, axis=-1, keepdims=True)

            z_h = zs[:, h * d_out:(h + 1) * d_out]       # [tsrc, Dout] bf16
            acc_ref[:, h * d_out:(h + 1) * d_out] = (
                a * acc_ref[:, h * d_out:(h + 1) * d_out]
                + jnp.dot(p.astype(jnp.bfloat16), z_h,
                          preferred_element_type=jnp.float32))
            m_ref[:, h:h + 1] = m_new

        @pl.when(j == pl.num_programs(1) - 1)
        def _():
            for h in range(num_heads):
                l_h = l_ref[:, h:h + 1]
                # guard for dst nodes with no in-edges (never hit with self loops)
                l_h = jnp.where(l_h == 0.0, 1.0, l_h)
                inv = pl.reciprocal(l_h, approx=True)    # EUP, not a divide
                acc_ref[:, h * d_out:(h + 1) * d_out] = (
                    acc_ref[:, h * d_out:(h + 1) * d_out] * inv)
            # single lane-dense store of the concatenated head outputs
            out_ref[...] = acc_ref[...].astype(out_ref.dtype)

    return kernel


def multihead_gat_layer(h, W, A, bias, *, out_dtype=jnp.bfloat16,
                        row_tile=256, dst_tile=256, src_tile=512):
    """One MultiHeadGATLayer with merge='cat'.

    h:    [N, Din]  node features (cast to bf16 for the MXU)
    W:    [H, Din, Dout]  fc weights (already transposed vs. torch Linear)
    A:    [H, 2, Dout]    attn_fc weights (row 0 -> src half, row 1 -> dst half)
    bias: [N, N] additive adjacency bias, [dst, src] oriented, bf16
    returns [N, H*Dout] in out_dtype (head outputs concatenated along lanes).
    """
    H, Din, Dout = W.shape
    N = h.shape[0]
    F = H * Dout

    # lane-dense fused projection weights: columns [h*Dout:(h+1)*Dout] == W[h]
    w_all = jnp.transpose(W, (1, 0, 2)).reshape(Din, F).astype(jnp.bfloat16)
    # block-diagonal attn weights: scores[:, 2h] = z_h . A[h,0]; [:, 2h+1] = z_h . A[h,1]
    a_mat = jnp.zeros((F, 2 * H), jnp.float32)
    for hh in range(H):
        a_mat = a_mat.at[hh * Dout:(hh + 1) * Dout, 2 * hh].set(A[hh, 0])
        a_mat = a_mat.at[hh * Dout:(hh + 1) * Dout, 2 * hh + 1].set(A[hh, 1])

    h_bf = h.astype(jnp.bfloat16)
    trow = _pick_tile(N, row_tile, 8)

    # ---- pass 1: fused projection + per-head edge scores --------------------
    z_all, scores = pl.pallas_call(
        _proj_kernel,
        out_shape=(jax.ShapeDtypeStruct((N, F), jnp.bfloat16),
                   jax.ShapeDtypeStruct((N, 2 * H), jnp.float32)),
        grid_spec=pltpu.PrefetchScalarGridSpec(
            num_scalar_prefetch=0,
            grid=(N // trow,),
            in_specs=[
                pl.BlockSpec((trow, Din), lambda i: (i, 0)),
                pl.BlockSpec((Din, F), lambda i: (0, 0)),
                pl.BlockSpec((F, 2 * H), lambda i: (0, 0)),
            ],
            out_specs=[
                pl.BlockSpec((trow, F), lambda i: (i, 0)),
                pl.BlockSpec((trow, 2 * H), lambda i: (i, 0)),
            ],
        ),
        compiler_params=pltpu.CompilerParams(
            dimension_semantics=("parallel",),
            vmem_limit_bytes=VMEM_LIMIT),
        cost_estimate=pl.CostEstimate(
            flops=2 * N * Din * F + 2 * N * F * 2 * H,
            transcendentals=0,
            bytes_accessed=N * Din * 2 + Din * F * 2 + N * F * 2 + N * 2 * H * 4),
    )(h_bf, w_all, a_mat)

    # tiny [N, 2H] -> [2H, N] transpose so src scores arrive as lane rows
    # (avoids a per-src-tile cross-lane transpose inside the kernel)
    scores_t = scores.T

    tdst = _pick_tile(N, dst_tile, 8)
    tsrc = _pick_tile(N, src_tile, 128)

    # ---- pass 2: flash-style masked softmax + aggregation -------------------
    out = pl.pallas_call(
        _make_attn_kernel(H, Dout),
        out_shape=jax.ShapeDtypeStruct((N, F), out_dtype),
        grid_spec=pltpu.PrefetchScalarGridSpec(
            num_scalar_prefetch=0,
            grid=(N // tdst, N // tsrc),
            in_specs=[
                pl.BlockSpec((tdst, 2 * H), lambda i, j: (i, 0)),   # dst scores
                pl.BlockSpec((2 * H, tsrc), lambda i, j: (0, j)),   # src scores (rows)
                pl.BlockSpec((tsrc, F), lambda i, j: (j, 0)),       # src z tile
                pl.BlockSpec((tdst, tsrc), lambda i, j: (i, j)),    # adjacency bias
            ],
            out_specs=pl.BlockSpec((tdst, F), lambda i, j: (i, 0)),
            scratch_shapes=[
                pltpu.VMEM((tdst, H), jnp.float32),   # running max per head
                pltpu.VMEM((tdst, H), jnp.float32),   # running denom per head
                pltpu.VMEM((tdst, F), jnp.float32),   # accumulator (all heads)
            ],
        ),
        compiler_params=pltpu.CompilerParams(
            dimension_semantics=("parallel", "arbitrary"),
            vmem_limit_bytes=VMEM_LIMIT),
        cost_estimate=pl.CostEstimate(
            flops=2 * N * N * F + 8 * N * N * H,
            transcendentals=2 * N * N * H,
            bytes_accessed=N * N * 2 + (N // tdst) * N * F * 2 + 2 * N * F * 2),
    )(scores, scores_t, z_all, bias)
    return out


def gat_forward(h, params, adj):
    """GAT.forward: layer1 (multi-head, cat) -> ELU -> layer2 (single head).

    adj is [src, dst]; it is converted ONCE to an additive bias oriented
    [dst, src] (0 for edges, -1e30 for non-edges) in bf16, shared by both layers.
    """
    bias = jnp.where(adj.T != 0, 0.0, MASK_BIAS).astype(jnp.bfloat16)
    h1 = multihead_gat_layer(h, params["W1"], params["A1"], bias,
                             out_dtype=jnp.bfloat16)
    h1 = jax.nn.elu(h1)                                   # F.elu, elementwise glue
    h2 = multihead_gat_layer(h1, params["W2"], params["A2"], bias,
                             out_dtype=jnp.float32)
    return h2


def init_params(key, in_dim, hidden_dim, out_dim, num_heads):
    k1, k2, k3, k4 = jax.random.split(key, 4)
    # layer1: num_heads independent GATLayer(in_dim -> hidden_dim)
    W1 = jax.random.normal(k1, (num_heads, in_dim, hidden_dim), jnp.float32) * 0.1
    A1 = jax.random.normal(k2, (num_heads, 2, hidden_dim), jnp.float32) * 0.1
    # layer2: single-head GATLayer(hidden_dim * num_heads -> out_dim)
    W2 = jax.random.normal(k3, (1, hidden_dim * num_heads, out_dim), jnp.float32) * 0.1
    A2 = jax.random.normal(k4, (1, 2, out_dim), jnp.float32) * 0.1
    return {"W1": W1, "A1": A1, "W2": W2, "A2": A2}


def build_graph(num_nodes):
    """Deterministic small graph: self loops + ring + skip-2 ring (adj[src, dst])."""
    adj = jnp.zeros((num_nodes, num_nodes), jnp.float32)
    idx = jnp.arange(num_nodes)
    adj = adj.at[idx, idx].set(1.0)                        # self loops
    adj = adj.at[idx, (idx + 1) % num_nodes].set(1.0)      # ring
    adj = adj.at[idx, (idx + 2) % num_nodes].set(1.0)      # skip-2 ring
    return adj


if __name__ == "__main__":
    N, IN_DIM, HIDDEN_DIM, OUT_DIM, NUM_HEADS = 8, 16, 8, 4, 2

    key = jax.random.PRNGKey(0)
    k_h, k_p = jax.random.split(key)
    h = jax.random.normal(k_h, (N, IN_DIM), jnp.float32)
    params = init_params(k_p, IN_DIM, HIDDEN_DIM, OUT_DIM, NUM_HEADS)
    adj = build_graph(N)

    out = jax.jit(gat_forward)(h, params, adj)
    out = jax.block_until_ready(out)
    assert out.shape == (N, OUT_DIM), out.shape
    assert bool(jnp.all(jnp.isfinite(out)))
    print("KERNEL_OK")
</pallas_src>

<mosaic_0001>
module attributes {stable_mosaic.version = 11 : i64} {
  func.func @_proj_kernel(%arg0: i32, %arg1: memref<8x16xbf16, #tpu.memory_space<vmem>>, %arg2: memref<16x16xbf16, #tpu.memory_space<vmem>>, %arg3: memref<16x4xf32, #tpu.memory_space<vmem>>, %arg4: memref<8x16xbf16, #tpu.memory_space<vmem>>, %arg5: memref<8x4xf32, #tpu.memory_space<vmem>>) attributes {dimension_semantics = [#tpu.dimension_semantics<parallel>], iteration_bounds = array<i64: 1>, scalar_prefetch = 0 : i64, scratch_operands = 0 : i64, tpu.core_type = #tpu.core_type<tc>, window_params = [{transform_indices = @transform_0, window_bounds = array<i64: 8, 16>}, {pipeline_mode = #tpu.pipeline_mode<synchronous>, transform_indices = @transform_1, window_bounds = array<i64: 16, 16>}, {pipeline_mode = #tpu.pipeline_mode<synchronous>, transform_indices = @transform_2, window_bounds = array<i64: 16, 4>}, {transform_indices = @transform_3, window_bounds = array<i64: 8, 16>}, {transform_indices = @transform_4, window_bounds = array<i64: 8, 4>}]} {
    %c0 = arith.constant 0 : index
    %c0_0 = arith.constant 0 : index
    %0 = vector.load %arg1[%c0, %c0_0] : memref<8x16xbf16, #tpu.memory_space<vmem>>, vector<8x16xbf16>
    %c0_1 = arith.constant 0 : index
    %c0_2 = arith.constant 0 : index
    %1 = vector.load %arg2[%c0_1, %c0_2] : memref<16x16xbf16, #tpu.memory_space<vmem>>, vector<16x16xbf16>
    %cst = arith.constant dense<0.000000e+00> : vector<8x16xf32>
    %2 = tpu.matmul %0, %1, %cst {dimension_numbers = #tpu.dot_dimension_numbers<[1], [0], [0], [1], [0, 0, 1, 1], [], []>} : vector<8x16xbf16>, vector<16x16xbf16>, vector<8x16xf32> -> vector<8x16xf32>
    %3 = arith.truncf %2 : vector<8x16xf32> to vector<8x16xbf16>
    %c0_3 = arith.constant 0 : index
    %c0_4 = arith.constant 0 : index
    %4 = vector.load %arg4[%c0_3, %c0_4] : memref<8x16xbf16, #tpu.memory_space<vmem>>, vector<8x16xbf16>
    tpu.vector_store %arg4[%c0_3, %c0_4], %3 {strides = array<i32>} : memref<8x16xbf16, #tpu.memory_space<vmem>>, vector<8x16xbf16>,
    %c0_5 = arith.constant 0 : index
    %c0_6 = arith.constant 0 : index
    %5 = vector.load %arg3[%c0_5, %c0_6] : memref<16x4xf32, #tpu.memory_space<vmem>>, vector<16x4xf32>
    %cst_7 = arith.constant dense<0.000000e+00> : vector<8x4xf32>
    %6 = tpu.matmul %2, %5, %cst_7 {dimension_numbers = #tpu.dot_dimension_numbers<[1], [0], [0], [1], [0, 0, 1, 1], [], []>} : vector<8x16xf32>, vector<16x4xf32>, vector<8x4xf32> -> vector<8x4xf32>
    %c0_8 = arith.constant 0 : index
    %c0_9 = arith.constant 0 : index
    %7 = vector.load %arg5[%c0_8, %c0_9] : memref<8x4xf32, #tpu.memory_space<vmem>>, vector<8x4xf32>
    tpu.vector_store %arg5[%c0_8, %c0_9], %6 {strides = array<i32>} : memref<8x4xf32, #tpu.memory_space<vmem>>, vector<8x4xf32>,
    return
  }
  func.func @transform_0(%arg0: i32) -> (i32, i32) {
    %c0_i32 = arith.constant 0 : i32
    %c0_i32_0 = arith.constant 0 : i32
    return %arg0, %c0_i32 : i32, i32
  }
  func.func @transform_1(%arg0: i32) -> (i32, i32) {
    %c0_i32 = arith.constant 0 : i32
    %c0_i32_0 = arith.constant 0 : i32
    %c0_i32_1 = arith.constant 0 : i32
    return %c0_i32, %c0_i32_0 : i32, i32
  }
  func.func @transform_2(%arg0: i32) -> (i32, i32) {
    %c0_i32 = arith.constant 0 : i32
    %c0_i32_0 = arith.constant 0 : i32
    %c0_i32_1 = arith.constant 0 : i32
    return %c0_i32, %c0_i32_0 : i32, i32
  }
  func.func @transform_3(%arg0: i32) -> (i32, i32) {
    %c0_i32 = arith.constant 0 : i32
    %c0_i32_0 = arith.constant 0 : i32
    return %arg0, %c0_i32 : i32, i32
  }
  func.func @transform_4(%arg0: i32) -> (i32, i32) {
    %c0_i32 = arith.constant 0 : i32
    %c0_i32_0 = arith.constant 0 : i32
    return %arg0, %c0_i32 : i32, i32
  }
}

module attributes {stable_mosaic.version = 11 : i64} {
  func.func @kernel(%arg0: i32, %arg1: i32, %arg2: memref<8x4xf32, #tpu.memory_space<vmem>>, %arg3: memref<4x8xf32, #tpu.memory_space<vmem>>, %arg4: memref<8x16xbf16, #tpu.memory_space<vmem>>, %arg5: memref<8x8xbf16, #tpu.memory_space<vmem>>, %arg6: memref<8x16xbf16, #tpu.memory_space<vmem>>, %arg7: memref<8x2xf32, #tpu.memory_space<vmem>>, %arg8: memref<8x2xf32, #tpu.memory_space<vmem>>, %arg9: memref<8x16xf32, #tpu.memory_space<vmem>>) attributes {dimension_semantics = [#tpu.dimension_semantics<parallel>, #tpu.dimension_semantics<arbitrary>], iteration_bounds = array<i64: 1, 1>, scalar_prefetch = 0 : i64, scratch_operands = 3 : i64, tpu.core_type = #tpu.core_type<tc>, window_params = [{transform_indices = @transform_0, window_bounds = array<i64: 8, 4>}, {transform_indices = @transform_1, window_bounds = array<i64: 4, 8>}, {transform_indices = @transform_2, window_bounds = array<i64: 8, 16>}, {transform_indices = @transform_3, window_bounds = array<i64: 8, 8>}, {transform_indices = @transform_4, window_bounds = array<i64: 8, 16>}]} {
    %c0_i32 = arith.constant 0 : i32
    %0 = arith.cmpi eq, %arg1, %c0_i32 : i32
    %1 = arith.extui %0 : i1 to i32
    %c0_i32_0 = arith.constant 0 : i32
    %2 = arith.cmpi ne, %1, %c0_i32_0 : i32
    scf.if %2 {
      %cst_41 = arith.constant -1.000000e+30 : f32
      %81 = vector.broadcast %cst_41 : f32 to vector<8x2xf32>
      %c0_42 = arith.constant 0 : index
      %c0_43 = arith.constant 0 : index
      %82 = vector.load %arg7[%c0_42, %c0_43] : memref<8x2xf32, #tpu.memory_space<vmem>>, vector<8x2xf32>
      tpu.vector_store %arg7[%c0_42, %c0_43], %81 {strides = array<i32>} : memref<8x2xf32, #tpu.memory_space<vmem>>, vector<8x2xf32>,
      %cst_44 = arith.constant 0.000000e+00 : f32
      %83 = vector.broadcast %cst_44 : f32 to vector<8x2xf32>
      %c0_45 = arith.constant 0 : index
      %c0_46 = arith.constant 0 : index
      %84 = vector.load %arg8[%c0_45, %c0_46] : memref<8x2xf32, #tpu.memory_space<vmem>>, vector<8x2xf32>
      tpu.vector_store %arg8[%c0_45, %c0_46], %83 {strides = array<i32>} : memref<8x2xf32, #tpu.memory_space<vmem>>, vector<8x2xf32>,
      %cst_47 = arith.constant 0.000000e+00 : f32
      %85 = vector.broadcast %cst_47 : f32 to vector<8x16xf32>
      %c0_48 = arith.constant 0 : index
      %c0_49 = arith.constant 0 : index
      %86 = vector.load %arg9[%c0_48, %c0_49] : memref<8x16xf32, #tpu.memory_space<vmem>>, vector<8x16xf32>
      tpu.vector_store %arg9[%c0_48, %c0_49], %85 {strides = array<i32>} : memref<8x16xf32, #tpu.memory_space<vmem>>, vector<8x16xf32>,
    } else {
    }
    %c0 = arith.constant 0 : index
    %c0_1 = arith.constant 0 : index
    %3 = vector.load %arg5[%c0, %c0_1] : memref<8x8xbf16, #tpu.memory_space<vmem>>, vector<8x8xbf16>
    %4 = arith.extf %3 : vector<8x8xbf16> to vector<8x8xf32>
    %c0_2 = arith.constant 0 : index
    %c0_3 = arith.constant 0 : index
    %5 = vector.load %arg2[%c0_2, %c0_3] : memref<8x4xf32, #tpu.memory_space<vmem>>, vector<8x4xf32>
    %c0_4 = arith.constant 0 : index
    %c0_5 = arith.constant 0 : index
    %6 = vector.load %arg3[%c0_4, %c0_5] : memref<4x8xf32, #tpu.memory_space<vmem>>, vector<4x8xf32>
    %c0_6 = arith.constant 0 : index
    %c0_7 = arith.constant 0 : index
    %7 = vector.load %arg4[%c0_6, %c0_7] : memref<8x16xbf16, #tpu.memory_space<vmem>>, vector<8x16xbf16>
    %8 = vector.extract_strided_slice %5 {offsets = [0, 1], sizes = [8, 1], strides = [1, 1]} : vector<8x4xf32> to vector<8x1xf32>
    %9 = vector.extract_strided_slice %6 {offsets = [0, 0], sizes = [1, 8], strides = [1, 1]} : vector<4x8xf32> to vector<1x8xf32>
    %10 = vector.broadcast %8 : vector<8x1xf32> to vector<8x8xf32>
    %11 = vector.broadcast %9 : vector<1x8xf32> to vector<8x8xf32>
    %12 = arith.addf %10, %11 : vector<8x8xf32>
    %cst = arith.constant 0.000000e+00 : f32
    %13 = vector.broadcast %cst : f32 to vector<8x8xf32>
    %14 = arith.cmpf ogt, %12, %13 : vector<8x8xf32>
    %cst_8 = arith.constant 0.00999999977 : f32
    %15 = vector.broadcast %cst_8 : f32 to vector<8x8xf32>
    %16 = arith.mulf %15, %12 : vector<8x8xf32>
    %17 = arith.select %14, %12, %16 : vector<8x8xi1>, vector<8x8xf32>
    %18 = arith.addf %17, %4 : vector<8x8xf32>
    %c0_9 = arith.constant 0 : index
    %c0_10 = arith.constant 0 : index
    %19 = vector.load %arg7[%c0_9, %c0_10] : memref<8x2xf32, #tpu.memory_space<vmem>>, vector<8x1xf32>
    %cst_11 = arith.constant dense<0xFF800000> : vector<8xf32>
    %20 = vector.multi_reduction <maximumf>, %18, %cst_11 [1] : vector<8x8xf32> to vector<8xf32>
    %21 = vector.shape_cast %20 : vector<8xf32> to vector<8x1xf32>
    %22 = arith.maximumf %19, %21 : vector<8x1xf32>
    %23 = arith.subf %19, %22 : vector<8x1xf32>
    %24 = math.exp %23 : vector<8x1xf32>
    %25 = vector.broadcast %22 : vector<8x1xf32> to vector<8x8xf32>
    %26 = arith.subf %18, %25 : vector<8x8xf32>
    %27 = math.exp %26 : vector<8x8xf32>
    %c0_12 = arith.constant 0 : index
    %c0_13 = arith.constant 0 : index
    %28 = vector.load %arg8[%c0_12, %c0_13] : memref<8x2xf32, #tpu.memory_space<vmem>>, vector<8x1xf32>
    %29 = arith.mulf %24, %28 : vector<8x1xf32>
    %cst_14 = arith.constant dense<0.000000e+00> : vector<8xf32>
    %30 = vector.multi_reduction <add>, %27, %cst_14 [1] : vector<8x8xf32> to vector<8xf32>
    %31 = vector.shape_cast %30 : vector<8xf32> to vector<8x1xf32>
    %32 = arith.addf %29, %31 : vector<8x1xf32>
    %c0_15 = arith.constant 0 : index
    %c0_16 = arith.constant 0 : index
    %33 = vector.load %arg8[%c0_15, %c0_16] : memref<8x2xf32, #tpu.memory_space<vmem>>, vector<8x1xf32>
    tpu.vector_store %arg8[%c0_15, %c0_16], %32 {strides = array<i32>} : memref<8x2xf32, #tpu.memory_space<vmem>>, vector<8x1xf32>,
    %34 = vector.extract_strided_slice %7 {offsets = [0, 0], sizes = [8, 8], strides = [1, 1]} : vector<8x16xbf16> to vector<8x8xbf16>
    %c0_17 = arith.constant 0 : index
    %c0_18 = arith.constant 0 : index
    %35 = vector.load %arg9[%c0_17, %c0_18] : memref<8x16xf32, #tpu.memory_space<vmem>>, vector<8x8xf32>
    %36 = vector.broadcast %24 : vector<8x1xf32> to vector<8x8xf32>
    %37 = arith.mulf %36, %35 : vector<8x8xf32>
    %38 = arith.truncf %27 : vector<8x8xf32> to vector<8x8xbf16>
    %cst_19 = arith.constant dense<0.000000e+00> : vector<8x8xf32>
    %39 = tpu.matmul %38, %34, %cst_19 {dimension_numbers = #tpu.dot_dimension_numbers<[1], [0], [0], [1], [0, 0, 1, 1], [], []>} : vector<8x8xbf16>, vector<8x8xbf16>, vector<8x8xf32> -> vector<8x8xf32>
    %40 = arith.addf %37, %39 : vector<8x8xf32>
    %c0_20 = arith.constant 0 : index
    %c0_21 = arith.constant 0 : index
    %41 = vector.load %arg9[%c0_20, %c0_21] : memref<8x16xf32, #tpu.memory_space<vmem>>, vector<8x8xf32>
    tpu.vector_store %arg9[%c0_20, %c0_21], %40 {strides = array<i32>} : memref<8x16xf32, #tpu.memory_space<vmem>>, vector<8x8xf32>,
    %c0_22 = arith.constant 0 : index
    %c0_23 = arith.constant 0 : index
    %42 = vector.load %arg7[%c0_22, %c0_23] : memref<8x2xf32, #tpu.memory_space<vmem>>, vector<8x1xf32>
    tpu.vector_store %arg7[%c0_22, %c0_23], %22 {strides = array<i32>} : memref<8x2xf32, #tpu.memory_space<vmem>>, vector<8x1xf32>,
    %43 = vector.extract_strided_slice %5 {offsets = [0, 3], sizes = [8, 1], strides = [1, 1]} : vector<8x4xf32> to vector<8x1xf32>
    %44 = vector.extract_strided_slice %6 {offsets = [2, 0], sizes = [1, 8], strides = [1, 1]} : vector<4x8xf32> to vector<1x8xf32>
    %45 = vector.broadcast %43 : vector<8x1xf32> to vector<8x8xf32>
    %46 = vector.broadcast %44 : vector<1x8xf32> to vector<8x8xf32>
    %47 = arith.addf %45, %46 : vector<8x8xf32>
    %cst_24 = arith.constant 0.000000e+00 : f32
    %48 = vector.broadcast %cst_24 : f32 to vector<8x8xf32>
    %49 = arith.cmpf ogt, %47, %48 : vector<8x8xf32>
    %cst_25 = arith.constant 0.00999999977 : f32
    %50 = vector.broadcast %cst_25 : f32 to vector<8x8xf32>
    %51 = arith.mulf %50, %47 : vector<8x8xf32>
    %52 = arith.select %49, %47, %51 : vector<8x8xi1>, vector<8x8xf32>
    %53 = arith.addf %52, %4 : vector<8x8xf32>
    %c0_26 = arith.constant 0 : index
    %c1 = arith.constant 1 : index
    %54 = vector.load %arg7[%c0_26, %c1] : memref<8x2xf32, #tpu.memory_space<vmem>>, vector<8x1xf32>
    %cst_27 = arith.constant dense<0xFF800000> : vector<8xf32>
    %55 = vector.multi_reduction <maximumf>, %53, %cst_27 [1] : vector<8x8xf32> to vector<8xf32>
    %56 = vector.shape_cast %55 : vector<8xf32> to vector<8x1xf32>
    %57 = arith.maximumf %54, %56 : vector<8x1xf32>
    %58 = arith.subf %54, %57 : vector<8x1xf32>
    %59 = math.exp %58 : vector<8x1xf32>
    %60 = vector.broadcast %57 : vector<8x1xf32> to vector<8x8xf32>
    %61 = arith.subf %53, %60 : vector<8x8xf32>
    %62 = math.exp %61 : vector<8x8xf32>
    %c0_28 = arith.constant 0 : index
    %c1_29 = arith.constant 1 : index
    %63 = vector.load %arg8[%c0_28, %c1_29] : memref<8x2xf32, #tpu.memory_space<vmem>>, vector<8x1xf32>
    %64 = arith.mulf %59, %63 : vector<8x1xf32>
    %cst_30 = arith.constant dense<0.000000e+00> : vector<8xf32>
    %65 = vector.multi_reduction <add>, %62, %cst_30 [1] : vector<8x8xf32> to vector<8xf32>
    %66 = vector.shape_cast %65 : vector<8xf32> to vector<8x1xf32>
    %67 = arith.addf %64, %66 : vector<8x1xf32>
    %c0_31 = arith.constant 0 : index
    %c1_32 = arith.constant 1 : index
    %68 = vector.load %arg8[%c0_31, %c1_32] : memref<8x2xf32, #tpu.memory_space<vmem>>, vector<8x1xf32>
    tpu.vector_store %arg8[%c0_31, %c1_32], %67 {strides = array<i32>} : memref<8x2xf32, #tpu.memory_space<vmem>>, vector<8x1xf32>,
    %69 = vector.extract_strided_slice %7 {offsets = [0, 8], sizes = [8, 8], strides = [1, 1]} : vector<8x16xbf16> to vector<8x8xbf16>
    %c0_33 = arith.constant 0 : index
    %c8 = arith.constant 8 : index
    %70 = vector.load %arg9[%c0_33, %c8] : memref<8x16xf32, #tpu.memory_space<vmem>>, vector<8x8xf32>
    %71 = vector.broadcast %59 : vector<8x1xf32> to vector<8x8xf32>
    %72 = arith.mulf %71, %70 : vector<8x8xf32>
    %73 = arith.truncf %62 : vector<8x8xf32> to vector<8x8xbf16>
    %cst_34 = arith.constant dense<0.000000e+00> : vector<8x8xf32>
    %74 = tpu.matmul %73, %69, %cst_34 {dimension_numbers = #tpu.dot_dimension_numbers<[1], [0], [0], [1], [0, 0, 1, 1], [], []>} : vector<8x8xbf16>, vector<8x8xbf16>, vector<8x8xf32> -> vector<8x8xf32>
    %75 = arith.addf %72, %74 : vector<8x8xf32>
    %c0_35 = arith.constant 0 : index
    %c8_36 = arith.constant 8 : index
    %76 = vector.load %arg9[%c0_35, %c8_36] : memref<8x16xf32, #tpu.memory_space<vmem>>, vector<8x8xf32>
    tpu.vector_store %arg9[%c0_35, %c8_36], %75 {strides = array<i32>} : memref<8x16xf32, #tpu.memory_space<vmem>>, vector<8x8xf32>,
    %c0_37 = arith.constant 0 : index
    %c1_38 = arith.constant 1 : index
    %77 = vector.load %arg7[%c0_37, %c1_38] : memref<8x2xf32, #tpu.memory_space<vmem>>, vector<8x1xf32>
    tpu.vector_store %arg7[%c0_37, %c1_38], %57 {strides = array<i32>} : memref<8x2xf32, #tpu.memory_space<vmem>>, vector<8x1xf32>,
    %c0_i32_39 = arith.constant 0 : i32
    %78 = arith.cmpi eq, %arg1, %c0_i32_39 : i32
    %79 = arith.extui %78 : i1 to i32
    %c0_i32_40 = arith.constant 0 : i32
    %80 = arith.cmpi ne, %79, %c0_i32_40 : i32
    scf.if %80 {
      %c0_41 = arith.constant 0 : index
      %c0_42 = arith.constant 0 : index
      %81 = vector.load %arg8[%c0_41, %c0_42] : memref<8x2xf32, #tpu.memory_space<vmem>>, vector<8x1xf32>
      %cst_43 = arith.constant 0.000000e+00 : f32
      %82 = vector.broadcast %cst_43 : f32 to vector<8x1xf32>
      %83 = arith.cmpf oeq, %81, %82 : vector<8x1xf32>
      %cst_44 = arith.constant 1.000000e+00 : f32
      %84 = vector.broadcast %cst_44 : f32 to vector<8x1xf32>
      %85 = arith.select %83, %84, %81 : vector<8x1xi1>, vector<8x1xf32>
      %86 = tpu.reciprocal %85 {approx = true} : vector<8x1xf32> -> vector<8x1xf32>
      %c0_45 = arith.constant 0 : index
      %c0_46 = arith.constant 0 : index
      %87 = vector.load %arg9[%c0_45, %c0_46] : memref<8x16xf32, #tpu.memory_space<vmem>>, vector<8x8xf32>
      %88 = vector.broadcast %86 : vector<8x1xf32> to vector<8x8xf32>
      %89 = arith.mulf %87, %88 : vector<8x8xf32>
      %c0_47 = arith.constant 0 : index
      %c0_48 = arith.constant 0 : index
      %90 = vector.load %arg9[%c0_47, %c0_48] : memref<8x16xf32, #tpu.memory_space<vmem>>, vector<8x8xf32>
      tpu.vector_store %arg9[%c0_47, %c0_48], %89 {strides = array<i32>} : memref<8x16xf32, #tpu.memory_space<vmem>>, vector<8x8xf32>,
      %c0_49 = arith.constant 0 : index
      %c1_50 = arith.constant 1 : index
      %91 = vector.load %arg8[%c0_49, %c1_50] : memref<8x2xf32, #tpu.memory_space<vmem>>, vector<8x1xf32>
      %cst_51 = arith.constant 0.000000e+00 : f32
      %92 = vector.broadcast %cst_51 : f32 to vector<8x1xf32>
      %93 = arith.cmpf oeq, %91, %92 : vector<8x1xf32>
      %cst_52 = arith.constant 1.000000e+00 : f32
      %94 = vector.broadcast %cst_52 : f32 to vector<8x1xf32>
      %95 = arith.select %93, %94, %91 : vector<8x1xi1>, vector<8x1xf32>
      %96 = tpu.reciprocal %95 {approx = true} : vector<8x1xf32> -> vector<8x1xf32>
      %c0_53 = arith.constant 0 : index
      %c8_54 = arith.constant 8 : index
      %97 = vector.load %arg9[%c0_53, %c8_54] : memref<8x16xf32, #tpu.memory_space<vmem>>, vector<8x8xf32>
      %98 = vector.broadcast %96 : vector<8x1xf32> to vector<8x8xf32>
      %99 = arith.mulf %97, %98 : vector<8x8xf32>
      %c0_55 = arith.constant 0 : index
      %c8_56 = arith.constant 8 : index
      %100 = vector.load %arg9[%c0_55, %c8_56] : memref<8x16xf32, #tpu.memory_space<vmem>>, vector<8x8xf32>
      tpu.vector_store %arg9[%c0_55, %c8_56], %99 {strides = array<i32>} : memref<8x16xf32, #tpu.memory_space<vmem>>, vector<8x8xf32>,
      %c0_57 = arith.constant 0 : index
      %c0_58 = arith.constant 0 : index
      %101 = vector.load %arg9[%c0_57, %c0_58] : memref<8x16xf32, #tpu.memory_space<vmem>>, vector<8x16xf32>
      %102 = arith.truncf %101 : vector<8x16xf32> to vector<8x16xbf16>
      %c0_59 = arith.constant 0 : index
      %c0_60 = arith.constant 0 : index
      %103 = vector.load %arg6[%c0_59, %c0_60] : memref<8x16xbf16, #tpu.memory_space<vmem>>, vector<8x16xbf16>
      tpu.vector_store %arg6[%c0_59, %c0_60], %102 {strides = array<i32>} : memref<8x16xbf16, #tpu.memory_space<vmem>>, vector<8x16xbf16>,
    } else {
    }
    return
  }
  func.func @transform_0(%arg0: i32, %arg1: i32) -> (i32, i32) {
    %c0_i32 = arith.constant 0 : i32
    %c0_i32_0 = arith.constant 0 : i32
    return %arg0, %c0_i32 : i32, i32
  }
  func.func @transform_1(%arg0: i32, %arg1: i32) -> (i32, i32) {
    %c0_i32 = arith.constant 0 : i32
    %c0_i32_0 = arith.constant 0 : i32
    return %c0_i32, %arg1 : i32, i32
  }
  func.func @transform_2(%arg0: i32, %arg1: i32) -> (i32, i32) {
    %c0_i32 = arith.constant 0 : i32
    %c0_i32_0 = arith.constant 0 : i32
    return %arg1, %c0_i32 : i32, i32
  }
  func.func @transform_3(%arg0: i32, %arg1: i32) -> (i32, i32) {
    %c0_i32 = arith.constant 0 : i32
    return %arg0, %arg1 : i32, i32
  }
  func.func @transform_4(%arg0: i32, %arg1: i32) -> (i32, i32) {
    %c0_i32 = arith.constant 0 : i32
    %c0_i32_0 = arith.constant 0 : i32
    return %arg0, %c0_i32 : i32, i32
  }
}

module attributes {stable_mosaic.version = 11 : i64} {
  func.func @_proj_kernel(%arg0: i32, %arg1: memref<8x16xbf16, #tpu.memory_space<vmem>>, %arg2: memref<16x4xbf16, #tpu.memory_space<vmem>>, %arg3: memref<4x2xf32, #tpu.memory_space<vmem>>, %arg4: memref<8x4xbf16, #tpu.memory_space<vmem>>, %arg5: memref<8x2xf32, #tpu.memory_space<vmem>>) attributes {dimension_semantics = [#tpu.dimension_semantics<parallel>], iteration_bounds = array<i64: 1>, scalar_prefetch = 0 : i64, scratch_operands = 0 : i64, tpu.core_type = #tpu.core_type<tc>, window_params = [{transform_indices = @transform_0, window_bounds = array<i64: 8, 16>}, {pipeline_mode = #tpu.pipeline_mode<synchronous>, transform_indices = @transform_1, window_bounds = array<i64: 16, 4>}, {pipeline_mode = #tpu.pipeline_mode<synchronous>, transform_indices = @transform_2, window_bounds = array<i64: 4, 2>}, {transform_indices = @transform_3, window_bounds = array<i64: 8, 4>}, {transform_indices = @transform_4, window_bounds = array<i64: 8, 2>}]} {
    %c0 = arith.constant 0 : index
    %c0_0 = arith.constant 0 : index
    %0 = vector.load %arg1[%c0, %c0_0] : memref<8x16xbf16, #tpu.memory_space<vmem>>, vector<8x16xbf16>
    %c0_1 = arith.constant 0 : index
    %c0_2 = arith.constant 0 : index
    %1 = vector.load %arg2[%c0_1, %c0_2] : memref<16x4xbf16, #tpu.memory_space<vmem>>, vector<16x4xbf16>
    %cst = arith.constant dense<0.000000e+00> : vector<8x4xf32>
    %2 = tpu.matmul %0, %1, %cst {dimension_numbers = #tpu.dot_dimension_numbers<[1], [0], [0], [1], [0, 0, 1, 1], [], []>} : vector<8x16xbf16>, vector<16x4xbf16>, vector<8x4xf32> -> vector<8x4xf32>
    %3 = arith.truncf %2 : vector<8x4xf32> to vector<8x4xbf16>
    %c0_3 = arith.constant 0 : index
    %c0_4 = arith.constant 0 : index
    %4 = vector.load %arg4[%c0_3, %c0_4] : memref<8x4xbf16, #tpu.memory_space<vmem>>, vector<8x4xbf16>
    tpu.vector_store %arg4[%c0_3, %c0_4], %3 {strides = array<i32>} : memref<8x4xbf16, #tpu.memory_space<vmem>>, vector<8x4xbf16>,
    %c0_5 = arith.constant 0 : index
    %c0_6 = arith.constant 0 : index
    %5 = vector.load %arg3[%c0_5, %c0_6] : memref<4x2xf32, #tpu.memory_space<vmem>>, vector<4x2xf32>
    %cst_7 = arith.constant dense<0.000000e+00> : vector<8x2xf32>
    %6 = tpu.matmul %2, %5, %cst_7 {dimension_numbers = #tpu.dot_dimension_numbers<[1], [0], [0], [1], [0, 0, 1, 1], [], []>} : vector<8x4xf32>, vector<4x2xf32>, vector<8x2xf32> -> vector<8x2xf32>
    %c0_8 = arith.constant 0 : index
    %c0_9 = arith.constant 0 : index
    %7 = vector.load %arg5[%c0_8, %c0_9] : memref<8x2xf32, #tpu.memory_space<vmem>>, vector<8x2xf32>
    tpu.vector_store %arg5[%c0_8, %c0_9], %6 {strides = array<i32>} : memref<8x2xf32, #tpu.memory_space<vmem>>, vector<8x2xf32>,
    return
  }
  func.func @transform_0(%arg0: i32) -> (i32, i32) {
    %c0_i32 = arith.constant 0 : i32
    %c0_i32_0 = arith.constant 0 : i32
    return %arg0, %c0_i32 : i32, i32
  }
  func.func @transform_1(%arg0: i32) -> (i32, i32) {
    %c0_i32 = arith.constant 0 : i32
    %c0_i32_0 = arith.constant 0 : i32
    %c0_i32_1 = arith.constant 0 : i32
    return %c0_i32, %c0_i32_0 : i32, i32
  }
  func.func @transform_2(%arg0: i32) -> (i32, i32) {
    %c0_i32 = arith.constant 0 : i32
    %c0_i32_0 = arith.constant 0 : i32
    %c0_i32_1 = arith.constant 0 : i32
    return %c0_i32, %c0_i32_0 : i32, i32
  }
  func.func @transform_3(%arg0: i32) -> (i32, i32) {
    %c0_i32 = arith.constant 0 : i32
    %c0_i32_0 = arith.constant 0 : i32
    return %arg0, %c0_i32 : i32, i32
  }
  func.func @transform_4(%arg0: i32) -> (i32, i32) {
    %c0_i32 = arith.constant 0 : i32
    %c0_i32_0 = arith.constant 0 : i32
    return %arg0, %c0_i32 : i32, i32
  }
}

module attributes {stable_mosaic.version = 11 : i64} {
  func.func @kernel(%arg0: i32, %arg1: i32, %arg2: memref<8x2xf32, #tpu.memory_space<vmem>>, %arg3: memref<2x8xf32, #tpu.memory_space<vmem>>, %arg4: memref<8x4xbf16, #tpu.memory_space<vmem>>, %arg5: memref<8x8xbf16, #tpu.memory_space<vmem>>, %arg6: memref<8x4xf32, #tpu.memory_space<vmem>>, %arg7: memref<8x1xf32, #tpu.memory_space<vmem>>, %arg8: memref<8x1xf32, #tpu.memory_space<vmem>>, %arg9: memref<8x4xf32, #tpu.memory_space<vmem>>) attributes {dimension_semantics = [#tpu.dimension_semantics<parallel>, #tpu.dimension_semantics<arbitrary>], iteration_bounds = array<i64: 1, 1>, scalar_prefetch = 0 : i64, scratch_operands = 3 : i64, tpu.core_type = #tpu.core_type<tc>, window_params = [{transform_indices = @transform_0, window_bounds = array<i64: 8, 2>}, {transform_indices = @transform_1, window_bounds = array<i64: 2, 8>}, {transform_indices = @transform_2, window_bounds = array<i64: 8, 4>}, {transform_indices = @transform_3, window_bounds = array<i64: 8, 8>}, {transform_indices = @transform_4, window_bounds = array<i64: 8, 4>}]} {
    %c0_i32 = arith.constant 0 : i32
    %0 = arith.cmpi eq, %arg1, %c0_i32 : i32
    %1 = arith.extui %0 : i1 to i32
    %c0_i32_0 = arith.constant 0 : i32
    %2 = arith.cmpi ne, %1, %c0_i32_0 : i32
    scf.if %2 {
      %cst_26 = arith.constant -1.000000e+30 : f32
      %45 = vector.broadcast %cst_26 : f32 to vector<8x1xf32>
      %c0_27 = arith.constant 0 : index
      %c0_28 = arith.constant 0 : index
      %46 = vector.load %arg7[%c0_27, %c0_28] : memref<8x1xf32, #tpu.memory_space<vmem>>, vector<8x1xf32>
      tpu.vector_store %arg7[%c0_27, %c0_28], %45 {strides = array<i32>} : memref<8x1xf32, #tpu.memory_space<vmem>>, vector<8x1xf32>,
      %cst_29 = arith.constant 0.000000e+00 : f32
      %47 = vector.broadcast %cst_29 : f32 to vector<8x1xf32>
      %c0_30 = arith.constant 0 : index
      %c0_31 = arith.constant 0 : index
      %48 = vector.load %arg8[%c0_30, %c0_31] : memref<8x1xf32, #tpu.memory_space<vmem>>, vector<8x1xf32>
      tpu.vector_store %arg8[%c0_30, %c0_31], %47 {strides = array<i32>} : memref<8x1xf32, #tpu.memory_space<vmem>>, vector<8x1xf32>,
      %cst_32 = arith.constant 0.000000e+00 : f32
      %49 = vector.broadcast %cst_32 : f32 to vector<8x4xf32>
      %c0_33 = arith.constant 0 : index
      %c0_34 = arith.constant 0 : index
      %50 = vector.load %arg9[%c0_33, %c0_34] : memref<8x4xf32, #tpu.memory_space<vmem>>, vector<8x4xf32>
      tpu.vector_store %arg9[%c0_33, %c0_34], %49 {strides = array<i32>} : memref<8x4xf32, #tpu.memory_space<vmem>>, vector<8x4xf32>,
    } else {
    }
    %c0 = arith.constant 0 : index
    %c0_1 = arith.constant 0 : index
    %3 = vector.load %arg5[%c0, %c0_1] : memref<8x8xbf16, #tpu.memory_space<vmem>>, vector<8x8xbf16>
    %4 = arith.extf %3 : vector<8x8xbf16> to vector<8x8xf32>
    %c0_2 = arith.constant 0 : index
    %c0_3 = arith.constant 0 : index
    %5 = vector.load %arg2[%c0_2, %c0_3] : memref<8x2xf32, #tpu.memory_space<vmem>>, vector<8x2xf32>
    %c0_4 = arith.constant 0 : index
    %c0_5 = arith.constant 0 : index
    %6 = vector.load %arg3[%c0_4, %c0_5] : memref<2x8xf32, #tpu.memory_space<vmem>>, vector<2x8xf32>
    %c0_6 = arith.constant 0 : index
    %c0_7 = arith.constant 0 : index
    %7 = vector.load %arg4[%c0_6, %c0_7] : memref<8x4xbf16, #tpu.memory_space<vmem>>, vector<8x4xbf16>
    %8 = vector.extract_strided_slice %5 {offsets = [0, 1], sizes = [8, 1], strides = [1, 1]} : vector<8x2xf32> to vector<8x1xf32>
    %9 = vector.extract_strided_slice %6 {offsets = [0, 0], sizes = [1, 8], strides = [1, 1]} : vector<2x8xf32> to vector<1x8xf32>
    %10 = vector.broadcast %8 : vector<8x1xf32> to vector<8x8xf32>
    %11 = vector.broadcast %9 : vector<1x8xf32> to vector<8x8xf32>
    %12 = arith.addf %10, %11 : vector<8x8xf32>
    %cst = arith.constant 0.000000e+00 : f32
    %13 = vector.broadcast %cst : f32 to vector<8x8xf32>
    %14 = arith.cmpf ogt, %12, %13 : vector<8x8xf32>
    %cst_8 = arith.constant 0.00999999977 : f32
    %15 = vector.broadcast %cst_8 : f32 to vector<8x8xf32>
    %16 = arith.mulf %15, %12 : vector<8x8xf32>
    %17 = arith.select %14, %12, %16 : vector<8x8xi1>, vector<8x8xf32>
    %18 = arith.addf %17, %4 : vector<8x8xf32>
    %c0_9 = arith.constant 0 : index
    %c0_10 = arith.constant 0 : index
    %19 = vector.load %arg7[%c0_9, %c0_10] : memref<8x1xf32, #tpu.memory_space<vmem>>, vector<8x1xf32>
    %cst_11 = arith.constant dense<0xFF800000> : vector<8xf32>
    %20 = vector.multi_reduction <maximumf>, %18, %cst_11 [1] : vector<8x8xf32> to vector<8xf32>
    %21 = vector.shape_cast %20 : vector<8xf32> to vector<8x1xf32>
    %22 = arith.maximumf %19, %21 : vector<8x1xf32>
    %23 = arith.subf %19, %22 : vector<8x1xf32>
    %24 = math.exp %23 : vector<8x1xf32>
    %25 = vector.broadcast %22 : vector<8x1xf32> to vector<8x8xf32>
    %26 = arith.subf %18, %25 : vector<8x8xf32>
    %27 = math.exp %26 : vector<8x8xf32>
    %c0_12 = arith.constant 0 : index
    %c0_13 = arith.constant 0 : index
    %28 = vector.load %arg8[%c0_12, %c0_13] : memref<8x1xf32, #tpu.memory_space<vmem>>, vector<8x1xf32>
    %29 = arith.mulf %24, %28 : vector<8x1xf32>
    %cst_14 = arith.constant dense<0.000000e+00> : vector<8xf32>
    %30 = vector.multi_reduction <add>, %27, %cst_14 [1] : vector<8x8xf32> to vector<8xf32>
    %31 = vector.shape_cast %30 : vector<8xf32> to vector<8x1xf32>
    %32 = arith.addf %29, %31 : vector<8x1xf32>
    %c0_15 = arith.constant 0 : index
    %c0_16 = arith.constant 0 : index
    %33 = vector.load %arg8[%c0_15, %c0_16] : memref<8x1xf32, #tpu.memory_space<vmem>>, vector<8x1xf32>
    tpu.vector_store %arg8[%c0_15, %c0_16], %32 {strides = array<i32>} : memref<8x1xf32, #tpu.memory_space<vmem>>, vector<8x1xf32>,
    %c0_17 = arith.constant 0 : index
    %c0_18 = arith.constant 0 : index
    %34 = vector.load %arg9[%c0_17, %c0_18] : memref<8x4xf32, #tpu.memory_space<vmem>>, vector<8x4xf32>
    %35 = vector.broadcast %24 : vector<8x1xf32> to vector<8x4xf32>
    %36 = arith.mulf %35, %34 : vector<8x4xf32>
    %37 = arith.truncf %27 : vector<8x8xf32> to vector<8x8xbf16>
    %cst_19 = arith.constant dense<0.000000e+00> : vector<8x4xf32>
    %38 = tpu.matmul %37, %7, %cst_19 {dimension_numbers = #tpu.dot_dimension_numbers<[1], [0], [0], [1], [0, 0, 1, 1], [], []>} : vector<8x8xbf16>, vector<8x4xbf16>, vector<8x4xf32> -> vector<8x4xf32>
    %39 = arith.addf %36, %38 : vector<8x4xf32>
    %c0_20 = arith.constant 0 : index
    %c0_21 = arith.constant 0 : index
    %40 = vector.load %arg9[%c0_20, %c0_21] : memref<8x4xf32, #tpu.memory_space<vmem>>, vector<8x4xf32>
    tpu.vector_store %arg9[%c0_20, %c0_21], %39 {strides = array<i32>} : memref<8x4xf32, #tpu.memory_space<vmem>>, vector<8x4xf32>,
    %c0_22 = arith.constant 0 : index
    %c0_23 = arith.constant 0 : index
    %41 = vector.load %arg7[%c0_22, %c0_23] : memref<8x1xf32, #tpu.memory_space<vmem>>, vector<8x1xf32>
    tpu.vector_store %arg7[%c0_22, %c0_23], %22 {strides = array<i32>} : memref<8x1xf32, #tpu.memory_space<vmem>>, vector<8x1xf32>,
    %c0_i32_24 = arith.constant 0 : i32
    %42 = arith.cmpi eq, %arg1, %c0_i32_24 : i32
    %43 = arith.extui %42 : i1 to i32
    %c0_i32_25 = arith.constant 0 : i32
    %44 = arith.cmpi ne, %43, %c0_i32_25 : i32
    scf.if %44 {
      %c0_26 = arith.constant 0 : index
      %c0_27 = arith.constant 0 : index
      %45 = vector.load %arg8[%c0_26, %c0_27] : memref<8x1xf32, #tpu.memory_space<vmem>>, vector<8x1xf32>
      %cst_28 = arith.constant 0.000000e+00 : f32
      %46 = vector.broadcast %cst_28 : f32 to vector<8x1xf32>
      %47 = arith.cmpf oeq, %45, %46 : vector<8x1xf32>
      %cst_29 = arith.constant 1.000000e+00 : f32
      %48 = vector.broadcast %cst_29 : f32 to vector<8x1xf32>
      %49 = arith.select %47, %48, %45 : vector<8x1xi1>, vector<8x1xf32>
      %50 = tpu.reciprocal %49 {approx = true} : vector<8x1xf32> -> vector<8x1xf32>
      %c0_30 = arith.constant 0 : index
      %c0_31 = arith.constant 0 : index
      %51 = vector.load %arg9[%c0_30, %c0_31] : memref<8x4xf32, #tpu.memory_space<vmem>>, vector<8x4xf32>
      %52 = vector.broadcast %50 : vector<8x1xf32> to vector<8x4xf32>
      %53 = arith.mulf %51, %52 : vector<8x4xf32>
      %c0_32 = arith.constant 0 : index
      %c0_33 = arith.constant 0 : index
      %54 = vector.load %arg9[%c0_32, %c0_33] : memref<8x4xf32, #tpu.memory_space<vmem>>, vector<8x4xf32>
      tpu.vector_store %arg9[%c0_32, %c0_33], %53 {strides = array<i32>} : memref<8x4xf32, #tpu.memory_space<vmem>>, vector<8x4xf32>,
      %c0_34 = arith.constant 0 : index
      %c0_35 = arith.constant 0 : index
      %55 = vector.load %arg9[%c0_34, %c0_35] : memref<8x4xf32, #tpu.memory_space<vmem>>, vector<8x4xf32>
      %c0_36 = arith.constant 0 : index
      %c0_37 = arith.constant 0 : index
      %56 = vector.load %arg6[%c0_36, %c0_37] : memref<8x4xf32, #tpu.memory_space<vmem>>, vector<8x4xf32>
      tpu.vector_store %arg6[%c0_36, %c0_37], %55 {strides = array<i32>} : memref<8x4xf32, #tpu.memory_space<vmem>>, vector<8x4xf32>,
    } else {
    }
    return
  }
  func.func @transform_0(%arg0: i32, %arg1: i32) -> (i32, i32) {
    %c0_i32 = arith.constant 0 : i32
    %c0_i32_0 = arith.constant 0 : i32
    return %arg0, %c0_i32 : i32, i32
  }
  func.func @transform_1(%arg0: i32, %arg1: i32) -> (i32, i32) {
    %c0_i32 = arith.constant 0 : i32
    %c0_i32_0 = arith.constant 0 : i32
    return %c0_i32, %arg1 : i32, i32
  }
  func.func @transform_2(%arg0: i32, %arg1: i32) -> (i32, i32) {
    %c0_i32 = arith.constant 0 : i32
    %c0_i32_0 = arith.constant 0 : i32
    return %arg1, %c0_i32 : i32, i32
  }
  func.func @transform_3(%arg0: i32, %arg1: i32) -> (i32, i32) {
    %c0_i32 = arith.constant 0 : i32
    return %arg0, %arg1 : i32, i32
  }
  func.func @transform_4(%arg0: i32, %arg1: i32) -> (i32, i32) {
    %c0_i32 = arith.constant 0 : i32
    %c0_i32_0 = arith.constant 0 : i32
    return %arg0, %c0_i32 : i32, i32
  }
}

</mosaic_0001>

<llo_original>
// kernel: gat_forward.4
$region0: #{gat_forward.4}
  #allocation0 [shape = 'u32[]', space=smem, size = 0x4, offset = 0x4, fixed_abs, tag = 'smem constant byte address 0x4 - core index']
  #allocation1 [shape = 'u32[144,128]{1,0:T(1,128)}', space=vmem, size = 0x12000, scoped, tag = 'internal scratch']
  %s0 = inlined_call_operand.vmem [shape: bf16[8,16], index: 0, kind: input, shape index: {}]
  %s1 = inlined_call_operand.vmem [shape: bf16[16,16], index: 1, kind: input, shape index: {}]
  %s2 = inlined_call_operand.vmem [shape: f32[16,4], index: 2, kind: input, shape index: {}]
  %s3 = inlined_call_operand.vmem [shape: bf16[8,16], index: 3, kind: output, shape index: {0}]
  %s4 = inlined_call_operand.vmem [shape: f32[8,4], index: 4, kind: output, shape index: {1}]
  %5 = xla_tuple %s3, %s4
  %s6 = sld [smem:[#allocation0]]
  $region30: #{gat_forward.4} parent=0
    _
  %s8 = ssub.s32 1, %s6
  %s9 = scalar_select 0, %s8, %s6
  // Predicated region
  $region2: #{gat_forward.4} parent=0 // pred_check
    _
  $region3: #{gat_forward.4} parent=0 // pred_check_branch
    %11 = sbr.rel (0) target = $region5
  $region4: #{gat_forward.4} parent=0 // pred_region
    _
  $region5: #{gat_forward.4} parent=0 // pred_fallthru
    _
  // Predicated region
  $region6: #{gat_forward.4} parent=0 // pred_check
    _
  $region7: #{gat_forward.4} parent=0 // pred_check_branch
    %13 = sbr.rel (0) target = $region9
  $region8: #{gat_forward.4} parent=0 // pred_region
    _
  $region9: #{gat_forward.4} parent=0 // pred_fallthru
    _
  // Predicated region
  $region10: #{gat_forward.4} parent=0 // pred_check
    _
  $region11: #{gat_forward.4} parent=0 // pred_check_branch
    %15 = sbr.rel (0) target = $region13
  $region12: #{gat_forward.4} parent=0 // pred_region
    _
  $region13: #{gat_forward.4} parent=0 // pred_fallthru
    _
  %v17 = vld [vmem:[%s0] sm:$0xf]
  %v18 = vld [vmem:[%s1] sm:$0xf]
  %v19 = vld [vmem:[%s1 + $0x4] sm:$0xf]
  %v22 = vunpack.c.l.b16 %v18
  %v23 = vunpack.c.l.b16 %v19
  %v24 = vpack.c.b16 %v23, %v22
  %vm26 = vcmask 130048
  %v28 = vsel %vm26, %v17, 0
  %30 = vmatprep.subr.bf16.mxu0 0
  %31 = vmatpush1.bf16.msra.mxu0 %v24
  %32 = vmatprep.subr.bf16.mxu0 0
  %33 = vmatpush1.bf16.msra.mxu0 0
  %34 = vmatprep.subr.bf16.mxu0 0
  %35 = vmatpush1.bf16.msra.mxu0 0
  %36 = vmatprep.subr.bf16.mxu0 0
  %37 = vmatpush1.bf16.msra.mxu0 0
  %38 = vmatprep.subr.bf16.mxu0 0
  %39 = vmatpush1.bf16.msra.mxu0 0
  %40 = vmatprep.subr.bf16.mxu0 0
  %41 = vmatpush1.bf16.msra.mxu0 0
  %42 = vmatprep.subr.bf16.mxu0 0
  %43 = vmatpush1.bf16.msra.mxu0 0
  %44 = vmatprep.subr.bf16.mxu0 0
  %45 = vmatpush1.bf16.msra.mxu0 0
  %46 = vmatprep.subr.bf16.mxu0 0
  %47 = vmatpush1.bf16.msra.mxu0 0
  %48 = vmatprep.subr.bf16.mxu0 0
  %49 = vmatpush1.bf16.msra.mxu0 0
  %50 = vmatprep.subr.bf16.mxu0 0
  %51 = vmatpush1.bf16.msra.mxu0 0
  %52 = vmatprep.subr.bf16.mxu0 0
  %53 = vmatpush1.bf16.msra.mxu0 0
  %54 = vmatprep.subr.bf16.mxu0 0
  %55 = vmatpush1.bf16.msra.mxu0 0
  %56 = vmatprep.subr.bf16.mxu0 0
  %57 = vmatpush1.bf16.msra.mxu0 0
  %58 = vmatprep.subr.bf16.mxu0 0
  %59 = vmatpush1.bf16.msra.mxu0 0
  %60 = vmatprep.subr.bf16.mxu0 0
  %61 = vmatpush1.bf16.msra.mxu0 0
  %62 = vmatprep.mubr.bf16.mxu0 0
  %63 = vmatmul.mubr.bf16.gmra.mrb[0].mxu0 %v28
  %v64 = vpop.f32.mrb[0].mxu0
  %v65 = vadd.f32 0.0, %v64
  %v66 = vpop.f32.mrb[0].mxu0
  %v67 = vpop.f32.mrb[0].mxu0
  %v68 = vpop.f32.mrb[0].mxu0
  %69 = vdwg.mxu0
  %v70 = vpack.c.bf16 %v65, %v65
  %vm71 = vcmask 125952
  %72 = vst.msk [vmem:[%s3] sm:$0xf] %vm71, %v70
  %v73 = vld [vmem:[%s2] sm:$0xff]
  %v74 = vld [vmem:[%s2 + $0x8] sm:$0xff]
  %v76 = vsel %vm26, %v65, 0
  %78 = vmatprep.subr.mxu0 0.0
  %79 = vmatpush1.msra.mxu0 %v73
  %80 = vmatprep.subr.mxu0 0.0
  %81 = vmatpush1.msra.mxu0 %v74
  %82 = vmatprep.subr.mxu0 0.0
  %83 = vmatpush1.msra.mxu0 0.0
  %84 = vmatprep.subr.mxu0 0.0
  %85 = vmatpush1.msra.mxu0 0.0
  %86 = vmatprep.subr.mxu0 0.0
  %87 = vmatpush1.msra.mxu0 0.0
  %88 = vmatprep.subr.mxu0 0.0
  %89 = vmatpush1.msra.mxu0 0.0
  %90 = vmatprep.subr.mxu0 0.0
  %91 = vmatpush1.msra.mxu0 0.0
  %92 = vmatprep.subr.mxu0 0.0
  %93 = vmatpush1.msra.mxu0 0.0
  %94 = vmatprep.subr.mxu0 0.0
  %95 = vmatpush1.msra.mxu0 0.0
  %96 = vmatprep.subr.mxu0 0.0
  %97 = vmatpush1.msra.mxu0 0.0
  %98 = vmatprep.subr.mxu0 0.0
  %99 = vmatpush1.msra.mxu0 0.0
  %100 = vmatprep.subr.mxu0 0.0
  %101 = vmatpush1.msra.mxu0 0.0
  %102 = vmatprep.subr.mxu0 0.0
  %103 = vmatpush1.msra.mxu0 0.0
  %104 = vmatprep.subr.mxu0 0.0
  %105 = vmatpush1.msra.mxu0 0.0
  %106 = vmatprep.subr.mxu0 0.0
  %107 = vmatpush1.msra.mxu0 0.0
  %108 = vmatprep.subr.mxu0 0.0
  %109 = vmatpush1.msra.mxu0 0.0
  %110 = vmatprep.subr.mxu0 0.0
  %111 = vmatpush1.msra.mxu0 0.0
  %112 = vmatprep.subr.mxu0 0.0
  %113 = vmatpush1.msra.mxu0 0.0
  %114 = vmatprep.subr.mxu0 0.0
  %115 = vmatpush1.msra.mxu0 0.0
  %116 = vmatprep.subr.mxu0 0.0
  %117 = vmatpush1.msra.mxu0 0.0
  %118 = vmatprep.subr.mxu0 0.0
  %119 = vmatpush1.msra.mxu0 0.0
  %120 = vmatprep.subr.mxu0 0.0
  %121 = vmatpush1.msra.mxu0 0.0
  %122 = vmatprep.subr.mxu0 0.0
  %123 = vmatpush1.msra.mxu0 0.0
  %124 = vmatprep.subr.mxu0 0.0
  %125 = vmatpush1.msra.mxu0 0.0
  %126 = vmatprep.subr.mxu0 0.0
  %127 = vmatpush1.msra.mxu0 0.0
  %128 = vmatprep.subr.mxu0 0.0
  %129 = vmatpush1.msra.mxu0 0.0
  %130 = vmatprep.subr.mxu0 0.0
  %131 = vmatpush1.msra.mxu0 0.0
  %132 = vmatprep.subr.mxu0 0.0
  %133 = vmatpush1.msra.mxu0 0.0
  %134 = vmatprep.subr.mxu0 0.0
  %135 = vmatpush1.msra.mxu0 0.0
  %136 = vmatprep.subr.mxu0 0.0
  %137 = vmatpush1.msra.mxu0 0.0
  %138 = vmatprep.subr.mxu0 0.0
  %139 = vmatpush1.msra.mxu0 0.0
  %140 = vmatprep.subr.mxu0 0.0
  %141 = vmatpush1.msra.mxu0 0.0
  %142 = vmatprep.mubr.f32.mxu0 0.0
  %143 = vmatmul.mubr.f32.gmra.mrb[0].mxu0 %v76
  %v144 = vpop.f32.mrb[0].mxu0
  %v145 = vadd.f32 0.0, %v144
  %v146 = vpop.f32.mrb[0].mxu0
  %147 = vdwg.mxu0
  %vm148 = vcmask 31744
  %149 = vst.msk [vmem:[%s4] sm:$0xff] %vm148, %v145
  // Predicated region
  $region14: #{gat_forward.4} parent=0 // pred_check
    _
  $region15: #{gat_forward.4} parent=0 // pred_check_branch
    %151 = sbr.rel (0) target = $region17
  $region16: #{gat_forward.4} parent=0 // pred_region
    _
  $region17: #{gat_forward.4} parent=0 // pred_fallthru
    _
  // Predicated region
  $region18: #{gat_forward.4} parent=0 // pred_check
    _
  $region19: #{gat_forward.4} parent=0 // pred_check_branch
    %153 = sbr.rel (0) target = $region21
  $region20: #{gat_forward.4} parent=0 // pred_region
    _
  $region21: #{gat_forward.4} parent=0 // pred_fallthru
    _
  // Predicated region
  $region22: #{gat_forward.4} parent=0 // pred_check
    _
  $region23: #{gat_forward.4} parent=0 // pred_check_branch
    %155 = sbr.rel (0) target = $region25
  $region24: #{gat_forward.4} parent=0 // pred_region
    _
  $region25: #{gat_forward.4} parent=0 // pred_fallthru
    _
  // Predicated region
  $region26: #{gat_forward.4} parent=0 // pred_check
    _
  $region27: #{gat_forward.4} parent=0 // pred_check_branch
    %157 = sbr.rel (0) target = $region29
  $region28: #{gat_forward.4} parent=0 // pred_region
    _
  $region29: #{gat_forward.4} parent=0 // pred_fallthru
    _

// kernel: gat_forward.5
$region0: #{gat_forward.5}
  #allocation0 [shape = 'u32[]', space=smem, size = 0x4, offset = 0x4, fixed_abs, tag = 'smem constant byte address 0x4 - core index']
  #allocation1 [shape = 'u32[144,128]{1,0:T(1,128)}', space=vmem, size = 0x12000, scoped, tag = 'internal scratch']
  #allocation2 [shape = 'f32[8,2]{1,0:T(8,128)}', space=vmem, size = 0x1000, scoped, tag = 'scratch operand']
  #allocation3 [shape = 'f32[8,2]{1,0:T(8,128)}', space=vmem, size = 0x1000, scoped, tag = 'scratch operand']
  #allocation4 [shape = 'f32[8,16]{1,0:T(8,128)}', space=vmem, size = 0x1000, scoped, tag = 'scratch operand']
  %s0 = inlined_call_operand.vmem [shape: f32[8,4], index: 0, kind: input, shape index: {}]
  %s1 = inlined_call_operand.vmem [shape: f32[4,8], index: 1, kind: input, shape index: {}]
  %s2 = inlined_call_operand.vmem [shape: bf16[8,16], index: 2, kind: input, shape index: {}]
  %s3 = inlined_call_operand.vmem [shape: bf16[8,8], index: 3, kind: input, shape index: {}]
  %s4 = inlined_call_operand.vmem [shape: bf16[8,16], index: 4, kind: output, shape index: {}]
  %s5 = sld [smem:[#allocation0]]
  $region34: #{gat_forward.5} parent=0
    _
  %s7 = ssub.s32 1, %s5
  %s8 = scalar_select 0, %s7, %s5
  // Predicated region
  $region2: #{gat_forward.5} parent=0 // pred_check
    _
  $region3: #{gat_forward.5} parent=0 // pred_check_branch
    %10 = sbr.rel (0) target = $region5
  $region4: #{gat_forward.5} parent=0 // pred_region
    _
  $region5: #{gat_forward.5} parent=0 // pred_fallthru
    _
  // Predicated region
  $region6: #{gat_forward.5} parent=0 // pred_check
    _
  $region7: #{gat_forward.5} parent=0 // pred_check_branch
    %12 = sbr.rel (0) target = $region9
  $region8: #{gat_forward.5} parent=0 // pred_region
    _
  $region9: #{gat_forward.5} parent=0 // pred_fallthru
    _
  // Predicated region
  $region10: #{gat_forward.5} parent=0 // pred_check
    _
  $region11: #{gat_forward.5} parent=0 // pred_check_branch
    %14 = sbr.rel (0) target = $region13
  $region12: #{gat_forward.5} parent=0 // pred_region
    _
  $region13: #{gat_forward.5} parent=0 // pred_fallthru
    _
  // Predicated region
  $region14: #{gat_forward.5} parent=0 // pred_check
    _
  $region15: #{gat_forward.5} parent=0 // pred_check_branch
    %16 = sbr.rel (0) target = $region17
  $region16: #{gat_forward.5} parent=0 // pred_region
    _
  $region17: #{gat_forward.5} parent=0 // pred_fallthru
    _
  %p18 = scmp.eq.s32.totalorder 0, 0
  // Predicated region
  $region18: #{gat_forward.5} parent=0 // pred_check
    %p19 = pneg %p18
  $region19: #{gat_forward.5} parent=0 // pred_check_branch
    %21 = sbr.rel (%p19) target = $region21
  $region20: #{gat_forward.5} parent=0 // pred_region
    %vm22 = vcmask 15360
    %23 = vst.msk [vmem:[#allocation2] sm:$0xff] %vm22, -1e+30
    %24 = vst.msk [vmem:[#allocation3] sm:$0xff] %vm22, 0.0
    %vm25 = vcmask 130048
    %26 = vst.msk [vmem:[#allocation4] sm:$0xff] %vm25, 0.0
  $region21: #{gat_forward.5} parent=0 // pred_fallthru
    _
  %v27 = vld [vmem:[%s3] sm:$0xf]
  %v28 = vunpack.c.l.bf16 %v27
  %v29 = vld [vmem:[%s0] sm:$0xff]
  %v30 = vld [vmem:[%s1] sm:$0xf]
  %v31 = vld [vmem:[%s2] sm:$0xf]
  %33 = vset.pattern.permute.xlu0 1
  %34 = vperm.xlu0 %33, %v29
  %v35 = vpop.permute.xlu0 %34
  %v37 = vlaneseq
  %v38 = vshrl.u32 %v37, 7
  %v39 = vsub.s32 0, %v38
  %v40 = vrot.slane %v30, %v39
  %v41 = vadd.f32 %v35, %v40
  %vm42 = vcmp.gt.f32.partialorder %v41, 0.0
  %v43 = vmul.f32 %v41, 0.01
  %v44 = vsel %vm42, %v41, %v43
  %v45 = vadd.f32 %v44, %v28
  %v46 = vld [vmem:[#allocation2] sm:$0xff]
  %vm47 = vcmask 64512
  %v48 = vsel %vm47, %v45, -inf
  %49 = vmax.xlane.f32.xlu0 %v48
  %v50 = vpop.xlane.xlu0 %49
  %v51 = vmax.f32 %v46, %v50
  %v52 = vsub.f32 %v46, %v51
  %v53 = vmul.f32 %v52, 1.442695
  %v54 = vpow.pop %v53
  %56 = vset.pattern.permute.xlu0 0
  %57 = vperm.xlu0 %56, %v51
  %v58 = vpop.permute.xlu0 %57
  %v60 = vsub.f32 %v45, %v58
  %v61 = vmul.f32 %v60, 1.442695
  %v62 = vpow.pop %v61
  %v63 = vld [vmem:[#allocation3] sm:$0xff]
  %v64 = vmul.f32 %v54, %v63
  %v65 = vsel %vm47, %v62, 0.0
  %66 = vadd.xlane.f32.xlu0 %v65
  %v67 = vpop.xlane.xlu0 %66
  %v68 = vadd.f32 %v64, %v67
  %vm69 = vcmask 7168
  %70 = vst.msk [vmem:[#allocation3] sm:$0xff] %vm69, %v68
  %v71 = vld [vmem:[#allocation4] sm:$0xff]
  %73 = vset.pattern.permute.xlu0 0
  %74 = vperm.xlu0 %73, %v54
  %v75 = vpop.permute.xlu0 %74
  %v77 = vmul.f32 %v75, %v71
  %v78 = vpack.c.bf16 %v62, %v62
  %v80 = vsel %vm47, %v78, 0
  %vm82 = vcmask 1043456
  %v84 = vsel %vm82, %v31, 0
  %86 = vmatprep.subr.bf16.mxu0 0
  %87 = vmatpush1.bf16.msra.mxu0 %v84
  %88 = vmatprep.subr.bf16.mxu0 0
  %89 = vmatpush1.bf16.msra.mxu0 0
  %90 = vmatprep.subr.bf16.mxu0 0
  %91 = vmatpush1.bf16.msra.mxu0 0
  %92 = vmatprep.subr.bf16.mxu0 0
  %93 = vmatpush1.bf16.msra.mxu0 0
  %94 = vmatprep.subr.bf16.mxu0 0
  %95 = vmatpush1.bf16.msra.mxu0 0
  %96 = vmatprep.subr.bf16.mxu0 0
  %97 = vmatpush1.bf16.msra.mxu0 0
  %98 = vmatprep.subr.bf16.mxu0 0
  %99 = vmatpush1.bf16.msra.mxu0 0
  %100 = vmatprep.subr.bf16.mxu0 0
  %101 = vmatpush1.bf16.msra.mxu0 0
  %102 = vmatprep.subr.bf16.mxu0 0
  %103 = vmatpush1.bf16.msra.mxu0 0
  %104 = vmatprep.subr.bf16.mxu0 0
  %105 = vmatpush1.bf16.msra.mxu0 0
  %106 = vmatprep.subr.bf16.mxu0 0
  %107 = vmatpush1.bf16.msra.mxu0 0
  %108 = vmatprep.subr.bf16.mxu0 0
  %109 = vmatpush1.bf16.msra.mxu0 0
  %110 = vmatprep.subr.bf16.mxu0 0
  %111 = vmatpush1.bf16.msra.mxu0 0
  %112 = vmatprep.subr.bf16.mxu0 0
  %113 = vmatpush1.bf16.msra.mxu0 0
  %114 = vmatprep.subr.bf16.mxu0 0
  %115 = vmatpush1.bf16.msra.mxu0 0
  %116 = vmatprep.subr.bf16.mxu0 0
  %117 = vmatpush1.bf16.msra.mxu0 0
  %118 = vmatprep.mubr.bf16.mxu0 0
  %119 = vmatmul.mubr.bf16.gmra.mrb[0].mxu0 %v80
  %v120 = vpop.f32.mrb[0].mxu0
  %v121 = vadd.f32 0.0, %v120
  %v122 = vpop.f32.mrb[0].mxu0
  %v123 = vpop.f32.mrb[0].mxu0
  %v124 = vpop.f32.mrb[0].mxu0
  %125 = vdwg.mxu0
  %v126 = vadd.f32 %v77, %v121
  %127 = vst.msk [vmem:[#allocation4] sm:$0xff] %vm47, %v126
  %128 = vst.msk [vmem:[#allocation2] sm:$0xff] %vm69, %v51
  %129 = vset.pattern.permute.xlu0 3
  %130 = vperm.xlu0 %129, %v29
  %v131 = vpop.permute.xlu0 %130
  %v133 = vlaneseq
  %v134 = vshrl.u32 %v133, 7
  %v135 = vsub.s32 2, %v134
  %v136 = vrot.slane %v30, %v135
  %v137 = vadd.f32 %v131, %v136
  %vm138 = vcmp.gt.f32.partialorder %v137, 0.0
  %v139 = vmul.f32 %v137, 0.01
  %v140 = vsel %vm138, %v137, %v139
  %v141 = vadd.f32 %v140, %v28
  %v142 = vld [vmem:[#allocation2] sm:$0xff]
  %v143 = vsel %vm47, %v141, -inf
  %144 = vmax.xlane.f32.xlu0 %v143
  %v145 = vpop.xlane.xlu0 %144
  %v146 = vmax.f32 %v142, %v145
  %v147 = vsub.f32 %v142, %v146
  %v148 = vmul.f32 %v147, 1.442695
  %v149 = vpow.pop %v148
  %151 = vset.pattern.permute.xlu0 1
  %152 = vperm.xlu0 %151, %v146
  %v153 = vpop.permute.xlu0 %152
  %v155 = vsub.f32 %v141, %v153
  %v156 = vmul.f32 %v155, 1.442695
  %v157 = vpow.pop %v156
  %v158 = vld [vmem:[#allocation3] sm:$0xff]
  %v159 = vmul.f32 %v149, %v158
  %v160 = vsel %vm47, %v157, 0.0
  %161 = vadd.xlane.f32.xlu0 %v160
  %v162 = vpop.xlane.xlu0 %161
  %v163 = vadd.f32 %v159, %v162
  %vm164 = vcmask 15368
  %165 = vst.msk [vmem:[#allocation3] sm:$0xff] %vm164, %v163
  %v166 = vld [vmem:[#allocation4] sm:$0xff]
  %168 = vset.pattern.permute.xlu0 1
  %169 = vperm.xlu0 %168, %v149
  %v170 = vpop.permute.xlu0 %169
  %v172 = vmul.f32 %v170, %v166
  %v173 = vpack.c.bf16 %v157, %v157
  %v175 = vunpack.c.l.b16 %v31
  %v176 = vpack.c.b16 %v175, %v175
  %177 = vrot.lane.b32.xlu0 %v176, 120
  %v178 = vpop.permute.xlu0 %177
  %v180 = vsel %vm47, %v173, 0
  %v183 = vsel %vm82, %v178, 0
  %185 = vmatprep.subr.bf16.mxu0 0
  %186 = vmatpush1.bf16.msra.mxu0 %v183
  %187 = vmatprep.subr.bf16.mxu0 0
  %188 = vmatpush1.bf16.msra.mxu0 0
  %189 = vmatprep.subr.bf16.mxu0 0
  %190 = vmatpush1.bf16.msra.mxu0 0
  %191 = vmatprep.subr.bf16.mxu0 0
  %192 = vmatpush1.bf16.msra.mxu0 0
  %193 = vmatprep.subr.bf16.mxu0 0
  %194 = vmatpush1.bf16.msra.mxu0 0
  %195 = vmatprep.subr.bf16.mxu0 0
  %196 = vmatpush1.bf16.msra.mxu0 0
  %197 = vmatprep.subr.bf16.mxu0 0
  %198 = vmatpush1.bf16.msra.mxu0 0
  %199 = vmatprep.subr.bf16.mxu0 0
  %200 = vmatpush1.bf16.msra.mxu0 0
  %201 = vmatprep.subr.bf16.mxu0 0
  %202 = vmatpush1.bf16.msra.mxu0 0
  %203 = vmatprep.subr.bf16.mxu0 0
  %204 = vmatpush1.bf16.msra.mxu0 0
  %205 = vmatprep.subr.bf16.mxu0 0
  %206 = vmatpush1.bf16.msra.mxu0 0
  %207 = vmatprep.subr.bf16.mxu0 0
  %208 = vmatpush1.bf16.msra.mxu0 0
  %209 = vmatprep.subr.bf16.mxu0 0
  %210 = vmatpush1.bf16.msra.mxu0 0
  %211 = vmatprep.subr.bf16.mxu0 0
  %212 = vmatpush1.bf16.msra.mxu0 0
  %213 = vmatprep.subr.bf16.mxu0 0
  %214 = vmatpush1.bf16.msra.mxu0 0
  %215 = vmatprep.subr.bf16.mxu0 0
  %216 = vmatpush1.bf16.msra.mxu0 0
  %217 = vmatprep.mubr.bf16.mxu0 0
  %218 = vmatmul.mubr.bf16.gmra.mrb[0].mxu0 %v180
  %v219 = vpop.f32.mrb[0].mxu0
  %v220 = vadd.f32 0.0, %v219
  %v221 = vpop.f32.mrb[0].mxu0
  %v222 = vpop.f32.mrb[0].mxu0
  %v223 = vpop.f32.mrb[0].mxu0
  %224 = vdwg.mxu0
  %226 = vrot.lane.b32.xlu0 %v220, 8
  %v227 = vpop.permute.xlu0 %226
  %v229 = vadd.f32 %v172, %v227
  %vm230 = vcmask 130112
  %231 = vst.msk [vmem:[#allocation4] sm:$0xff] %vm230, %v229
  %232 = vst.msk [vmem:[#allocation2] sm:$0xff] %vm164, %v146
  // Predicated region
  $region22: #{gat_forward.5} parent=0 // pred_check
    %p233 = pneg %p18
  $region23: #{gat_forward.5} parent=0 // pred_check_branch
    %235 = sbr.rel (%p233) target = $region25
  $region24: #{gat_forward.5} parent=0 // pred_region
    %v236 = vld [vmem:[#allocation3] sm:$0xff]
    %vm237 = vcmp.eq.f32.partialorder %v236, 0.0
    %v238 = vsel %vm237, 1.0, %v236
    %v239 = vrcp.pop %v238
    %v240 = vld [vmem:[#allocation4] sm:$0xff]
    %242 = vset.pattern.permute.xlu0 0
    %243 = vperm.xlu0 %242, %v239
    %v244 = vpop.permute.xlu0 %243
    %v246 = vmul.f32 %v240, %v244
    %247 = vst.msk [vmem:[#allocation4] sm:$0xff] %vm47, %v246
    %v248 = vld [vmem:[#allocation3] sm:$0xff]
    %vm249 = vcmp.eq.f32.partialorder %v248, 0.0
    %v250 = vsel %vm249, 1.0, %v248
    %v251 = vrcp.pop %v250
    %v252 = vld [vmem:[#allocation4] sm:$0xff]
    %254 = vset.pattern.permute.xlu0 1
    %255 = vperm.xlu0 %254, %v251
    %v256 = vpop.permute.xlu0 %255
    %v258 = vmul.f32 %v252, %v256
    %259 = vst.msk [vmem:[#allocation4] sm:$0xff] %vm230, %v258
    %v260 = vld [vmem:[#allocation4] sm:$0xff]
    %v261 = vpack.c.bf16 %v260, %v260
    %vm262 = vcmask 125952
    %263 = vst.msk [vmem:[%s4] sm:$0xf] %vm262, %v261
  $region25: #{gat_forward.5} parent=0 // pred_fallthru
    _
  // Predicated region
  $region26: #{gat_forward.5} parent=0 // pred_check
    _
  $region27: #{gat_forward.5} parent=0 // pred_check_branch
    %265 = sbr.rel (0) target = $region29
  $region28: #{gat_forward.5} parent=0 // pred_region
    _
  $region29: #{gat_forward.5} parent=0 // pred_fallthru
    _
  // Predicated region
  $region30: #{gat_forward.5} parent=0 // pred_check
    _
  $region31: #{gat_forward.5} parent=0 // pred_check_branch
    %267 = sbr.rel (0) target = $region33
  $region32: #{gat_forward.5} parent=0 // pred_region
    _
  $region33: #{gat_forward.5} parent=0 // pred_fallthru
    _

// kernel: gat_forward.6
$region0: #{gat_forward.6}
  #allocation0 [shape = 'u32[]', space=smem, size = 0x4, offset = 0x4, fixed_abs, tag = 'smem constant byte address 0x4 - core index']
  #allocation1 [shape = 'u32[144,128]{1,0:T(1,128)}', space=vmem, size = 0x12000, scoped, tag = 'internal scratch']
  %s0 = inlined_call_operand.vmem [shape: bf16[8,16], index: 0, kind: input, shape index: {}]
  %s1 = inlined_call_operand.vmem [shape: bf16[16,4], index: 1, kind: input, shape index: {}]
  %s2 = inlined_call_operand.vmem [shape: f32[4,2], index: 2, kind: input, shape index: {}]
  %s3 = inlined_call_operand.vmem [shape: bf16[8,4], index: 3, kind: output, shape index: {0}]
  %s4 = inlined_call_operand.vmem [shape: f32[8,2], index: 4, kind: output, shape index: {1}]
  %5 = xla_tuple %s3, %s4
  %s6 = sld [smem:[#allocation0]]
  $region30: #{gat_forward.6} parent=0
    _
  %s8 = ssub.s32 1, %s6
  %s9 = scalar_select 0, %s8, %s6
  // Predicated region
  $region2: #{gat_forward.6} parent=0 // pred_check
    _
  $region3: #{gat_forward.6} parent=0 // pred_check_branch
    %11 = sbr.rel (0) target = $region5
  $region4: #{gat_forward.6} parent=0 // pred_region
    _
  $region5: #{gat_forward.6} parent=0 // pred_fallthru
    _
  // Predicated region
  $region6: #{gat_forward.6} parent=0 // pred_check
    _
  $region7: #{gat_forward.6} parent=0 // pred_check_branch
    %13 = sbr.rel (0) target = $region9
  $region8: #{gat_forward.6} parent=0 // pred_region
    _
  $region9: #{gat_forward.6} parent=0 // pred_fallthru
    _
  // Predicated region
  $region10: #{gat_forward.6} parent=0 // pred_check
    _
  $region11: #{gat_forward.6} parent=0 // pred_check_branch
    %15 = sbr.rel (0) target = $region13
  $region12: #{gat_forward.6} parent=0 // pred_region
    _
  $region13: #{gat_forward.6} parent=0 // pred_fallthru
    _
  %v17 = vld [vmem:[%s0] sm:$0xf]
  %v18 = vld [vmem:[%s1] sm:$0xf]
  %v19 = vld [vmem:[%s1 + $0x4] sm:$0xf]
  %v22 = vunpack.c.l.b16 %v18
  %v23 = vunpack.c.l.b16 %v19
  %v24 = vpack.c.b16 %v23, %v22
  %vm26 = vcmask 130048
  %v28 = vsel %vm26, %v17, 0
  %30 = vmatprep.subr.bf16.mxu0 0
  %31 = vmatpush1.bf16.msra.mxu0 %v24
  %32 = vmatprep.subr.bf16.mxu0 0
  %33 = vmatpush1.bf16.msra.mxu0 0
  %34 = vmatprep.subr.bf16.mxu0 0
  %35 = vmatpush1.bf16.msra.mxu0 0
  %36 = vmatprep.subr.bf16.mxu0 0
  %37 = vmatpush1.bf16.msra.mxu0 0
  %38 = vmatprep.subr.bf16.mxu0 0
  %39 = vmatpush1.bf16.msra.mxu0 0
  %40 = vmatprep.subr.bf16.mxu0 0
  %41 = vmatpush1.bf16.msra.mxu0 0
  %42 = vmatprep.subr.bf16.mxu0 0
  %43 = vmatpush1.bf16.msra.mxu0 0
  %44 = vmatprep.subr.bf16.mxu0 0
  %45 = vmatpush1.bf16.msra.mxu0 0
  %46 = vmatprep.subr.bf16.mxu0 0
  %47 = vmatpush1.bf16.msra.mxu0 0
  %48 = vmatprep.subr.bf16.mxu0 0
  %49 = vmatpush1.bf16.msra.mxu0 0
  %50 = vmatprep.subr.bf16.mxu0 0
  %51 = vmatpush1.bf16.msra.mxu0 0
  %52 = vmatprep.subr.bf16.mxu0 0
  %53 = vmatpush1.bf16.msra.mxu0 0
  %54 = vmatprep.subr.bf16.mxu0 0
  %55 = vmatpush1.bf16.msra.mxu0 0
  %56 = vmatprep.subr.bf16.mxu0 0
  %57 = vmatpush1.bf16.msra.mxu0 0
  %58 = vmatprep.subr.bf16.mxu0 0
  %59 = vmatpush1.bf16.msra.mxu0 0
  %60 = vmatprep.subr.bf16.mxu0 0
  %61 = vmatpush1.bf16.msra.mxu0 0
  %62 = vmatprep.mubr.bf16.mxu0 0
  %63 = vmatmul.mubr.bf16.gmra.mrb[0].mxu0 %v28
  %v64 = vpop.f32.mrb[0].mxu0
  %v65 = vadd.f32 0.0, %v64
  %v66 = vpop.f32.mrb[0].mxu0
  %v67 = vpop.f32.mrb[0].mxu0
  %v68 = vpop.f32.mrb[0].mxu0
  %69 = vdwg.mxu0
  %v70 = vpack.c.bf16 %v65, %v65
  %vm71 = vcmask 27648
  %72 = vst.msk [vmem:[%s3] sm:$0xf] %vm71, %v70
  %v73 = vld [vmem:[%s2] sm:$0xf]
  %vm74 = vcmask 31744
  %v76 = vsel %vm74, %v65, 0
  %vm78 = vcmask 1043456
  %v80 = vsel %vm78, %v73, 0
  %82 = vmatprep.subr.mxu0 0.0
  %83 = vmatpush1.msra.mxu0 %v80
  %84 = vmatprep.subr.mxu0 0.0
  %85 = vmatpush1.msra.mxu0 0.0
  %86 = vmatprep.subr.mxu0 0.0
  %87 = vmatpush1.msra.mxu0 0.0
  %88 = vmatprep.subr.mxu0 0.0
  %89 = vmatpush1.msra.mxu0 0.0
  %90 = vmatprep.subr.mxu0 0.0
  %91 = vmatpush1.msra.mxu0 0.0
  %92 = vmatprep.subr.mxu0 0.0
  %93 = vmatpush1.msra.mxu0 0.0
  %94 = vmatprep.subr.mxu0 0.0
  %95 = vmatpush1.msra.mxu0 0.0
  %96 = vmatprep.subr.mxu0 0.0
  %97 = vmatpush1.msra.mxu0 0.0
  %98 = vmatprep.subr.mxu0 0.0
  %99 = vmatpush1.msra.mxu0 0.0
  %100 = vmatprep.subr.mxu0 0.0
  %101 = vmatpush1.msra.mxu0 0.0
  %102 = vmatprep.subr.mxu0 0.0
  %103 = vmatpush1.msra.mxu0 0.0
  %104 = vmatprep.subr.mxu0 0.0
  %105 = vmatpush1.msra.mxu0 0.0
  %106 = vmatprep.subr.mxu0 0.0
  %107 = vmatpush1.msra.mxu0 0.0
  %108 = vmatprep.subr.mxu0 0.0
  %109 = vmatpush1.msra.mxu0 0.0
  %110 = vmatprep.subr.mxu0 0.0
  %111 = vmatpush1.msra.mxu0 0.0
  %112 = vmatprep.subr.mxu0 0.0
  %113 = vmatpush1.msra.mxu0 0.0
  %114 = vmatprep.subr.mxu0 0.0
  %115 = vmatpush1.msra.mxu0 0.0
  %116 = vmatprep.subr.mxu0 0.0
  %117 = vmatpush1.msra.mxu0 0.0
  %118 = vmatprep.subr.mxu0 0.0
  %119 = vmatpush1.msra.mxu0 0.0
  %120 = vmatprep.subr.mxu0 0.0
  %121 = vmatpush1.msra.mxu0 0.0
  %122 = vmatprep.subr.mxu0 0.0
  %123 = vmatpush1.msra.mxu0 0.0
  %124 = vmatprep.subr.mxu0 0.0
  %125 = vmatpush1.msra.mxu0 0.0
  %126 = vmatprep.subr.mxu0 0.0
  %127 = vmatpush1.msra.mxu0 0.0
  %128 = vmatprep.subr.mxu0 0.0
  %129 = vmatpush1.msra.mxu0 0.0
  %130 = vmatprep.subr.mxu0 0.0
  %131 = vmatpush1.msra.mxu0 0.0
  %132 = vmatprep.subr.mxu0 0.0
  %133 = vmatpush1.msra.mxu0 0.0
  %134 = vmatprep.subr.mxu0 0.0
  %135 = vmatpush1.msra.mxu0 0.0
  %136 = vmatprep.subr.mxu0 0.0
  %137 = vmatpush1.msra.mxu0 0.0
  %138 = vmatprep.subr.mxu0 0.0
  %139 = vmatpush1.msra.mxu0 0.0
  %140 = vmatprep.subr.mxu0 0.0
  %141 = vmatpush1.msra.mxu0 0.0
  %142 = vmatprep.subr.mxu0 0.0
  %143 = vmatpush1.msra.mxu0 0.0
  %144 = vmatprep.subr.mxu0 0.0
  %145 = vmatpush1.msra.mxu0 0.0
  %146 = vmatprep.mubr.f32.mxu0 0.0
  %147 = vmatmul.mubr.f32.gmra.mrb[0].mxu0 %v76
  %v148 = vpop.f32.mrb[0].mxu0
  %v149 = vadd.f32 0.0, %v148
  %v150 = vpop.f32.mrb[0].mxu0
  %151 = vdwg.mxu0
  %vm152 = vcmask 15360
  %153 = vst.msk [vmem:[%s4] sm:$0xff] %vm152, %v149
  // Predicated region
  $region14: #{gat_forward.6} parent=0 // pred_check
    _
  $region15: #{gat_forward.6} parent=0 // pred_check_branch
    %155 = sbr.rel (0) target = $region17
  $region16: #{gat_forward.6} parent=0 // pred_region
    _
  $region17: #{gat_forward.6} parent=0 // pred_fallthru
    _
  // Predicated region
  $region18: #{gat_forward.6} parent=0 // pred_check
    _
  $region19: #{gat_forward.6} parent=0 // pred_check_branch
    %157 = sbr.rel (0) target = $region21
  $region20: #{gat_forward.6} parent=0 // pred_region
    _
  $region21: #{gat_forward.6} parent=0 // pred_fallthru
    _
  // Predicated region
  $region22: #{gat_forward.6} parent=0 // pred_check
    _
  $region23: #{gat_forward.6} parent=0 // pred_check_branch
    %159 = sbr.rel (0) target = $region25
  $region24: #{gat_forward.6} parent=0 // pred_region
    _
  $region25: #{gat_forward.6} parent=0 // pred_fallthru
    _
  // Predicated region
  $region26: #{gat_forward.6} parent=0 // pred_check
    _
  $region27: #{gat_forward.6} parent=0 // pred_check_branch
    %161 = sbr.rel (0) target = $region29
  $region28: #{gat_forward.6} parent=0 // pred_region
    _
  $region29: #{gat_forward.6} parent=0 // pred_fallthru
    _

// kernel: gat_forward.7
$region0: #{gat_forward.7}
  #allocation0 [shape = 'u32[]', space=smem, size = 0x4, offset = 0x4, fixed_abs, tag = 'smem constant byte address 0x4 - core index']
  #allocation1 [shape = 'u32[144,128]{1,0:T(1,128)}', space=vmem, size = 0x12000, scoped, tag = 'internal scratch']
  #allocation2 [shape = 'f32[8,1]{1,0:T(8,128)}', space=vmem, size = 0x1000, scoped, tag = 'scratch operand']
  #allocation3 [shape = 'f32[8,1]{1,0:T(8,128)}', space=vmem, size = 0x1000, scoped, tag = 'scratch operand']
  #allocation4 [shape = 'f32[8,4]{1,0:T(8,128)}', space=vmem, size = 0x1000, scoped, tag = 'scratch operand']
  %s0 = inlined_call_operand.vmem [shape: f32[8,2], index: 0, kind: input, shape index: {}]
  %s1 = inlined_call_operand.vmem [shape: f32[2,8], index: 1, kind: input, shape index: {}]
  %s2 = inlined_call_operand.vmem [shape: bf16[8,4], index: 2, kind: input, shape index: {}]
  %s3 = inlined_call_operand.vmem [shape: bf16[8,8], index: 3, kind: input, shape index: {}]
  %s4 = inlined_call_operand.vmem [shape: f32[8,4], index: 4, kind: output, shape index: {}]
  %s5 = sld [smem:[#allocation0]]
  $region34: #{gat_forward.7} parent=0
    _
  %s7 = ssub.s32 1, %s5
  %s8 = scalar_select 0, %s7, %s5
  // Predicated region
  $region2: #{gat_forward.7} parent=0 // pred_check
    _
  $region3: #{gat_forward.7} parent=0 // pred_check_branch
    %10 = sbr.rel (0) target = $region5
  $region4: #{gat_forward.7} parent=0 // pred_region
    _
  $region5: #{gat_forward.7} parent=0 // pred_fallthru
    _
  // Predicated region
  $region6: #{gat_forward.7} parent=0 // pred_check
    _
  $region7: #{gat_forward.7} parent=0 // pred_check_branch
    %12 = sbr.rel (0) target = $region9
  $region8: #{gat_forward.7} parent=0 // pred_region
    _
  $region9: #{gat_forward.7} parent=0 // pred_fallthru
    _
  // Predicated region
  $region10: #{gat_forward.7} parent=0 // pred_check
    _
  $region11: #{gat_forward.7} parent=0 // pred_check_branch
    %14 = sbr.rel (0) target = $region13
  $region12: #{gat_forward.7} parent=0 // pred_region
    _
  $region13: #{gat_forward.7} parent=0 // pred_fallthru
    _
  // Predicated region
  $region14: #{gat_forward.7} parent=0 // pred_check
    _
  $region15: #{gat_forward.7} parent=0 // pred_check_branch
    %16 = sbr.rel (0) target = $region17
  $region16: #{gat_forward.7} parent=0 // pred_region
    _
  $region17: #{gat_forward.7} parent=0 // pred_fallthru
    _
  %p18 = scmp.eq.s32.totalorder 0, 0
  // Predicated region
  $region18: #{gat_forward.7} parent=0 // pred_check
    %p19 = pneg %p18
  $region19: #{gat_forward.7} parent=0 // pred_check_branch
    %21 = sbr.rel (%p19) target = $region21
  $region20: #{gat_forward.7} parent=0 // pred_region
    %vm22 = vcmask 7168
    %23 = vst.msk [vmem:[#allocation2] sm:$0xff] %vm22, -1e+30
    %24 = vst.msk [vmem:[#allocation3] sm:$0xff] %vm22, 0.0
    %vm25 = vcmask 31744
    %26 = vst.msk [vmem:[#allocation4] sm:$0xff] %vm25, 0.0
  $region21: #{gat_forward.7} parent=0 // pred_fallthru
    _
  %v27 = vld [vmem:[%s3] sm:$0xf]
  %v28 = vunpack.c.l.bf16 %v27
  %v29 = vld [vmem:[%s0] sm:$0xff]
  %v30 = vld [vmem:[%s1] sm:$0x3]
  %v31 = vld [vmem:[%s2] sm:$0xf]
  %33 = vset.pattern.permute.xlu0 1
  %34 = vperm.xlu0 %33, %v29
  %v35 = vpop.permute.xlu0 %34
  %v37 = vlaneseq
  %v38 = vshrl.u32 %v37, 7
  %v39 = vsub.s32 0, %v38
  %v40 = vrot.slane %v30, %v39
  %v41 = vadd.f32 %v35, %v40
  %vm42 = vcmp.gt.f32.partialorder %v41, 0.0
  %v43 = vmul.f32 %v41, 0.01
  %v44 = vsel %vm42, %v41, %v43
  %v45 = vadd.f32 %v44, %v28
  %v46 = vld [vmem:[#allocation2] sm:$0xff]
  %vm47 = vcmask 64512
  %v48 = vsel %vm47, %v45, -inf
  %49 = vmax.xlane.f32.xlu0 %v48
  %v50 = vpop.xlane.xlu0 %49
  %v51 = vmax.f32 %v46, %v50
  %v52 = vsub.f32 %v46, %v51
  %v53 = vmul.f32 %v52, 1.442695
  %v54 = vpow.pop %v53
  %56 = vset.pattern.permute.xlu0 0
  %57 = vperm.xlu0 %56, %v51
  %v58 = vpop.permute.xlu0 %57
  %v60 = vsub.f32 %v45, %v58
  %v61 = vmul.f32 %v60, 1.442695
  %v62 = vpow.pop %v61
  %v63 = vld [vmem:[#allocation3] sm:$0xff]
  %v64 = vmul.f32 %v54, %v63
  %v65 = vsel %vm47, %v62, 0.0
  %66 = vadd.xlane.f32.xlu0 %v65
  %v67 = vpop.xlane.xlu0 %66
  %v68 = vadd.f32 %v64, %v67
  %vm69 = vcmask 7168
  %70 = vst.msk [vmem:[#allocation3] sm:$0xff] %vm69, %v68
  %v71 = vld [vmem:[#allocation4] sm:$0xff]
  %73 = vset.pattern.permute.xlu0 0
  %74 = vperm.xlu0 %73, %v54
  %v75 = vpop.permute.xlu0 %74
  %v77 = vmul.f32 %v75, %v71
  %v78 = vpack.c.bf16 %v62, %v62
  %v80 = vsel %vm47, %v78, 0
  %vm82 = vcmask 1043456
  %v84 = vsel %vm82, %v31, 0
  %86 = vmatprep.subr.bf16.mxu0 0
  %87 = vmatpush1.bf16.msra.mxu0 %v84
  %88 = vmatprep.subr.bf16.mxu0 0
  %89 = vmatpush1.bf16.msra.mxu0 0
  %90 = vmatprep.subr.bf16.mxu0 0
  %91 = vmatpush1.bf16.msra.mxu0 0
  %92 = vmatprep.subr.bf16.mxu0 0
  %93 = vmatpush1.bf16.msra.mxu0 0
  %94 = vmatprep.subr.bf16.mxu0 0
  %95 = vmatpush1.bf16.msra.mxu0 0
  %96 = vmatprep.subr.bf16.mxu0 0
  %97 = vmatpush1.bf16.msra.mxu0 0
  %98 = vmatprep.subr.bf16.mxu0 0
  %99 = vmatpush1.bf16.msra.mxu0 0
  %100 = vmatprep.subr.bf16.mxu0 0
  %101 = vmatpush1.bf16.msra.mxu0 0
  %102 = vmatprep.subr.bf16.mxu0 0
  %103 = vmatpush1.bf16.msra.mxu0 0
  %104 = vmatprep.subr.bf16.mxu0 0
  %105 = vmatpush1.bf16.msra.mxu0 0
  %106 = vmatprep.subr.bf16.mxu0 0
  %107 = vmatpush1.bf16.msra.mxu0 0
  %108 = vmatprep.subr.bf16.mxu0 0
  %109 = vmatpush1.bf16.msra.mxu0 0
  %110 = vmatprep.subr.bf16.mxu0 0
  %111 = vmatpush1.bf16.msra.mxu0 0
  %112 = vmatprep.subr.bf16.mxu0 0
  %113 = vmatpush1.bf16.msra.mxu0 0
  %114 = vmatprep.subr.bf16.mxu0 0
  %115 = vmatpush1.bf16.msra.mxu0 0
  %116 = vmatprep.subr.bf16.mxu0 0
  %117 = vmatpush1.bf16.msra.mxu0 0
  %118 = vmatprep.mubr.bf16.mxu0 0
  %119 = vmatmul.mubr.bf16.gmra.mrb[0].mxu0 %v80
  %v120 = vpop.f32.mrb[0].mxu0
  %v121 = vadd.f32 0.0, %v120
  %v122 = vpop.f32.mrb[0].mxu0
  %v123 = vpop.f32.mrb[0].mxu0
  %v124 = vpop.f32.mrb[0].mxu0
  %125 = vdwg.mxu0
  %v126 = vadd.f32 %v77, %v121
  %vm127 = vcmask 31744
  %128 = vst.msk [vmem:[#allocation4] sm:$0xff] %vm127, %v126
  %129 = vst.msk [vmem:[#allocation2] sm:$0xff] %vm69, %v51
  // Predicated region
  $region22: #{gat_forward.7} parent=0 // pred_check
    %p130 = pneg %p18
  $region23: #{gat_forward.7} parent=0 // pred_check_branch
    %132 = sbr.rel (%p130) target = $region25
  $region24: #{gat_forward.7} parent=0 // pred_region
    %v133 = vld [vmem:[#allocation3] sm:$0xff]
    %vm134 = vcmp.eq.f32.partialorder %v133, 0.0
    %v135 = vsel %vm134, 1.0, %v133
    %v136 = vrcp.pop %v135
    %v137 = vld [vmem:[#allocation4] sm:$0xff]
    %139 = vset.pattern.permute.xlu0 0
    %140 = vperm.xlu0 %139, %v136
    %v141 = vpop.permute.xlu0 %140
    %v143 = vmul.f32 %v137, %v141
    %144 = vst.msk [vmem:[#allocation4] sm:$0xff] %vm127, %v143
    %v145 = vld [vmem:[#allocation4] sm:$0xff]
    %146 = vst.msk [vmem:[%s4] sm:$0xff] %vm127, %v145
  $region25: #{gat_forward.7} parent=0 // pred_fallthru
    _
  // Predicated region
  $region26: #{gat_forward.7} parent=0 // pred_check
    _
  $region27: #{gat_forward.7} parent=0 // pred_check_branch
    %148 = sbr.rel (0) target = $region29
  $region28: #{gat_forward.7} parent=0 // pred_region
    _
  $region29: #{gat_forward.7} parent=0 // pred_fallthru
    _
  // Predicated region
  $region30: #{gat_forward.7} parent=0 // pred_check
    _
  $region31: #{gat_forward.7} parent=0 // pred_check_branch
    %150 = sbr.rel (0) target = $region33
  $region32: #{gat_forward.7} parent=0 // pred_region
    _
  $region33: #{gat_forward.7} parent=0 // pred_fallthru
    _

</llo_original>
